<compile_context>
chip_gen: v7x
topology: tpu7x:2x2x1
jax: 0.10.0
libtpu: 0.0.40
codegen_flags: <defaults>
</compile_context>

<pallas_src>
import functools
import math

import numpy as np

import jax
import jax.numpy as jnp
from jax.experimental import pallas as pl
from jax.experimental.pallas import tpu as pltpu


def _round_up(x, m):
  return -(-x // m) * m


@functools.lru_cache(maxsize=None)
def _dft_operators(a, b, m_pad):
  """Precompose rfft2 / irfft2 (norm='ortho') into two stacked real matrices.

  With N = a*b, M = a*(b//2 + 1):
    Pstk : (2*m_pad, N)  rows [0:M] = Re(rfft2 rows), rows [m_pad:m_pad+M] = Im(...)
    Qcat : (N, 2*m_pad)  cols [0:M] = d(irfft2)/d(Re), cols [m_pad:m_pad+M] = d/d(Im)
  so  [xr; xi] = Pstk @ x_flat   and   irfft2(Z) = Qcat @ [Re(Z); Im(Z)]  (flattened
  row-major, matching x.reshape(B, a, b, C) and complex_weight.reshape(M, C)).
  Padded rows/cols are zero.
  """
  n = a * b
  w = b // 2 + 1
  m = a * w
  assert m_pad >= m

  # Forward map: rfft2 of each spatial basis image.
  eye_n = np.eye(n, dtype=np.float64).reshape(n, a, b)
  P = np.fft.rfft2(eye_n, axes=(1, 2), norm='ortho').reshape(n, m).T        # (m, n) complex

  # Inverse map (R-linear in Re / Im): irfft2 of each half-spectrum basis.
  eye_m = np.eye(m, dtype=np.float64).reshape(m, a, w)
  Qr = np.fft.irfft2(eye_m, s=(a, b), axes=(1, 2), norm='ortho').reshape(m, n).T
  Qi = np.fft.irfft2(1j * eye_m, s=(a, b), axes=(1, 2), norm='ortho').reshape(m, n).T

  p_stk = np.zeros((2 * m_pad, n), np.float32)
  p_stk[:m] = P.real
  p_stk[m_pad:m_pad + m] = P.imag

  q_cat = np.zeros((n, 2 * m_pad), np.float32)
  q_cat[:, :m] = Qr
  q_cat[:, m_pad:m_pad + m] = Qi
  return p_stk, q_cat


def _global_filter_kernel(x_ref, p_ref, q_ref, wr_ref, wi_ref, o_ref,
                          *, m_pad, compute_dtype):
  """One (channel-block, batch) step: y = irfft2(rfft2(x) * W); channels ride lanes."""
  x = x_ref[0].astype(compute_dtype)                                # (N, CT)

  # rfft2: one stacked MXU matmul -> [xr; xi], f32 accumulation.
  s = jnp.dot(p_ref[...], x, preferred_element_type=jnp.float32)    # (2*Mp, CT) f32
  xr = s[:m_pad]                                                    # tile-aligned split
  xi = s[m_pad:]

  # Elementwise complex spectral filter in f32 (per-channel weight, shared over batch).
  wr = wr_ref[...]
  wi = wi_ref[...]
  yr = xr * wr - xi * wi
  yi = xr * wi + xi * wr

  # irfft2: one stacked MXU matmul over the concatenated [yr; yi].
  t = jnp.concatenate([yr, yi], axis=0).astype(compute_dtype)       # (2*Mp, CT)
  o_ref[0] = jnp.dot(q_ref[...], t, preferred_element_type=jnp.float32)


def global_filter(x, complex_weight, spatial_size=None, *,
                  compute_dtype=jnp.bfloat16):
  """Pallas implementation of GlobalFilter.forward.

  x: (B, N, C) (any float dtype).  complex_weight: (h, w, C, 2) float32,
  h == a, w == b//2 + 1.  Returns (B, N, C) float32 (matching the PyTorch module).
  """
  B, N, C = x.shape
  if spatial_size is None:
    a = b = int(math.sqrt(N))
    assert a * b == N, f"N={N} is not a perfect square; pass spatial_size"
  else:
    a, b = spatial_size
    assert a * b == N
  h, w_half, dim, two = complex_weight.shape
  assert two == 2 and dim == C and h == a and w_half == b // 2 + 1

  M = a * w_half
  Mp = _round_up(M, 16)          # sublane-aligned Re/Im split (f32 tile 8, bf16 pack 16)

  p_np, q_np = _dft_operators(a, b, Mp)
  p_op = jnp.asarray(p_np, dtype=compute_dtype)        # (2*Mp, N)
  q_op = jnp.asarray(q_np, dtype=compute_dtype)        # (N, 2*Mp)

  # Weights channels-last; (h, w) -> M flatten is a free row-major reshape. Kept f32.
  wr = complex_weight[..., 0].reshape(M, C).astype(jnp.float32)
  wi = complex_weight[..., 1].reshape(M, C).astype(jnp.float32)
  if Mp != M:
    wr = jnp.pad(wr, ((0, Mp - M), (0, 0)))
    wi = jnp.pad(wi, ((0, Mp - M), (0, 0)))

  # Lane-dense channels: pad C to a multiple of 128 (avoids masked vst.msk stores).
  C_pad = _round_up(C, 128)
  if C_pad != C:
    x_in = jnp.pad(x, ((0, 0), (0, 0), (0, C_pad - C)))
    wr = jnp.pad(wr, ((0, 0), (0, C_pad - C)))
    wi = jnp.pad(wi, ((0, 0), (0, C_pad - C)))
  else:
    x_in = x            # native dtype; cast to compute_dtype happens inside the kernel

  x_item = jnp.dtype(x_in.dtype).itemsize
  op_item = jnp.dtype(compute_dtype).itemsize

  def vmem_bytes(ct):
    ops = 2 * (2 * Mp) * N * op_item                 # Pstk + Qcat, single-buffered
    wts = 2 * 2 * Mp * ct * 4                        # Wr, Wi (double-buffered, f32)
    xb = 2 * N * ct * x_item                         # x block (double-buffered)
    ob = 2 * N * ct * 4                              # out block (double-buffered, f32)
    inter = (2 * Mp) * ct * (4 + op_item) + N * ct * (op_item + 4)   # s, t, casts
    return ops + wts + xb + ob + inter

  budget = 32 * 1024 * 1024
  c_tile = 128
  for cand in range(C_pad, 0, -128):
    if C_pad % cand == 0 and vmem_bytes(cand) <= budget:
      c_tile = cand
      break
  n_c = C_pad // c_tile
  # v7x has 2 TensorCores: keep at least one parallel axis with extent >= 2 when possible.
  if B == 1 and n_c == 1 and C_pad % 256 == 0:
    c_tile //= 2
    n_c = 2

  vmem_limit = int(min(100 * 2**20, max(32 * 2**20, 2 * vmem_bytes(c_tile))))

  kernel = functools.partial(_global_filter_kernel, m_pad=Mp,
                             compute_dtype=compute_dtype)

  def build(single_buffer_consts):
    const_kwargs = dict(pipeline_mode=pl.Buffered(1)) if single_buffer_consts else {}
    return pl.pallas_call(
        kernel,
        # Channel blocks outer, batch inner: Wr/Wi (index depends only on j) stay
        # VMEM-resident across the whole batch sweep.
        grid=(n_c, B),
        in_specs=[
            pl.BlockSpec((1, N, c_tile), lambda j, i: (i, 0, j)),              # x
            pl.BlockSpec((2 * Mp, N), lambda j, i: (0, 0), **const_kwargs),    # Pstk
            pl.BlockSpec((N, 2 * Mp), lambda j, i: (0, 0), **const_kwargs),    # Qcat
            pl.BlockSpec((Mp, c_tile), lambda j, i: (0, j)),                   # Wr
            pl.BlockSpec((Mp, c_tile), lambda j, i: (0, j)),                   # Wi
        ],
        out_specs=pl.BlockSpec((1, N, c_tile), lambda j, i: (i, 0, j)),
        out_shape=jax.ShapeDtypeStruct((B, N, C_pad), jnp.float32),
        compiler_params=pltpu.CompilerParams(
            dimension_semantics=("parallel", "parallel"),
            vmem_limit_bytes=vmem_limit),
    )

  try:
    out = build(True)(x_in, p_op, q_op, wr, wi)
  except Exception:
    # Fallback if this JAX version rejects pipeline_mode=pl.Buffered(1).
    out = build(False)(x_in, p_op, q_op, wr, wi)

  if C_pad != C:
    out = out[..., :C]
  return out


if __name__ == "__main__":
  # Small shapes consistent with the module: dim=C=4, spatial a=b=8 -> N=64,
  # weight shape (h=a=8, w=b//2+1=5, C=4, 2).
  B, C = 2, 4
  a = b = 8
  N = a * b
  h, w_half = a, b // 2 + 1

  key = jax.random.PRNGKey(0)
  kx, kw = jax.random.split(key)
  x = jax.random.normal(kx, (B, N, C), dtype=jnp.float32)
  complex_weight = 0.02 * jax.random.normal(kw, (h, w_half, C, 2), dtype=jnp.float32)

  y = jax.block_until_ready(global_filter(x, complex_weight))

  # Reference (f32 FFT). bf16 MXU operands with f32 accumulation => relaxed tolerance.
  x4 = x.reshape(B, a, b, C)
  W = complex_weight[..., 0] + 1j * complex_weight[..., 1]
  y_ref = jnp.fft.irfft2(jnp.fft.rfft2(x4, axes=(1, 2), norm='ortho') * W,
                         s=(a, b), axes=(1, 2), norm='ortho').reshape(B, N, C)
  y_ref = jax.block_until_ready(y_ref)

  assert y.shape == (B, N, C) and y.dtype == jnp.float32
  max_err = float(jnp.max(jnp.abs(y - y_ref)))
  assert max_err < 5e-3, max_err

  print("KERNEL_OK")
</pallas_src>

<mosaic_0001>
module attributes {stable_mosaic.version = 11 : i64} {
  func.func @_global_filter_kernel(%arg0: i32, %arg1: i32, %arg2: memref<1x64x128xf32, #tpu.memory_space<vmem>>, %arg3: memref<96x64xbf16, #tpu.memory_space<vmem>>, %arg4: memref<64x96xbf16, #tpu.memory_space<vmem>>, %arg5: memref<48x128xf32, #tpu.memory_space<vmem>>, %arg6: memref<48x128xf32, #tpu.memory_space<vmem>>, %arg7: memref<1x64x128xf32, #tpu.memory_space<vmem>>) attributes {dimension_semantics = [#tpu.dimension_semantics<parallel>, #tpu.dimension_semantics<parallel>], iteration_bounds = array<i64: 1, 2>, scalar_prefetch = 0 : i64, scratch_operands = 0 : i64, tpu.core_type = #tpu.core_type<tc>, window_params = [{transform_indices = @transform_0, window_bounds = array<i64: 1, 64, 128>}, {pipeline_mode = #tpu.pipeline_mode<synchronous>, transform_indices = @transform_1, window_bounds = array<i64: 96, 64>}, {pipeline_mode = #tpu.pipeline_mode<synchronous>, transform_indices = @transform_2, window_bounds = array<i64: 64, 96>}, {transform_indices = @transform_3, window_bounds = array<i64: 48, 128>}, {transform_indices = @transform_4, window_bounds = array<i64: 48, 128>}, {transform_indices = @transform_5, window_bounds = array<i64: 1, 64, 128>}]} {
    %c0 = arith.constant 0 : index
    %c0_0 = arith.constant 0 : index
    %c0_1 = arith.constant 0 : index
    %0 = vector.load %arg2[%c0, %c0_0, %c0_1] : memref<1x64x128xf32, #tpu.memory_space<vmem>>, vector<1x64x128xf32>
    %1 = vector.shape_cast %0 : vector<1x64x128xf32> to vector<64x128xf32>
    %2 = arith.truncf %1 : vector<64x128xf32> to vector<64x128xbf16>
    %c0_2 = arith.constant 0 : index
    %c0_3 = arith.constant 0 : index
    %3 = vector.load %arg3[%c0_2, %c0_3] : memref<96x64xbf16, #tpu.memory_space<vmem>>, vector<96x64xbf16>
    %cst = arith.constant dense<0.000000e+00> : vector<96x128xf32>
    %4 = tpu.matmul %3, %2, %cst {dimension_numbers = #tpu.dot_dimension_numbers<[1], [0], [0], [1], [0, 0, 1, 1], [], []>} : vector<96x64xbf16>, vector<64x128xbf16>, vector<96x128xf32> -> vector<96x128xf32>
    %5 = vector.extract_strided_slice %4 {offsets = [0, 0], sizes = [48, 128], strides = [1, 1]} : vector<96x128xf32> to vector<48x128xf32>
    %6 = vector.extract_strided_slice %4 {offsets = [48, 0], sizes = [48, 128], strides = [1, 1]} : vector<96x128xf32> to vector<48x128xf32>
    %c0_4 = arith.constant 0 : index
    %c0_5 = arith.constant 0 : index
    %7 = vector.load %arg5[%c0_4, %c0_5] : memref<48x128xf32, #tpu.memory_space<vmem>>, vector<48x128xf32>
    %c0_6 = arith.constant 0 : index
    %c0_7 = arith.constant 0 : index
    %8 = vector.load %arg6[%c0_6, %c0_7] : memref<48x128xf32, #tpu.memory_space<vmem>>, vector<48x128xf32>
    %9 = arith.mulf %5, %7 : vector<48x128xf32>
    %10 = arith.mulf %6, %8 : vector<48x128xf32>
    %11 = arith.subf %9, %10 : vector<48x128xf32>
    %12 = arith.mulf %5, %8 : vector<48x128xf32>
    %13 = arith.mulf %6, %7 : vector<48x128xf32>
    %14 = arith.addf %12, %13 : vector<48x128xf32>
    %15 = tpu.concatenate %11, %14 in 0 : vector<48x128xf32>, vector<48x128xf32> -> vector<96x128xf32>
    %16 = arith.truncf %15 : vector<96x128xf32> to vector<96x128xbf16>
    %c0_8 = arith.constant 0 : index
    %c0_9 = arith.constant 0 : index
    %17 = vector.load %arg4[%c0_8, %c0_9] : memref<64x96xbf16, #tpu.memory_space<vmem>>, vector<64x96xbf16>
    %cst_10 = arith.constant dense<0.000000e+00> : vector<64x128xf32>
    %18 = tpu.matmul %17, %16, %cst_10 {dimension_numbers = #tpu.dot_dimension_numbers<[1], [0], [0], [1], [0, 0, 1, 1], [], []>} : vector<64x96xbf16>, vector<96x128xbf16>, vector<64x128xf32> -> vector<64x128xf32>
    %c0_11 = arith.constant 0 : index
    %c0_12 = arith.constant 0 : index
    %c0_13 = arith.constant 0 : index
    %19 = vector.load %arg7[%c0_11, %c0_12, %c0_13] : memref<1x64x128xf32, #tpu.memory_space<vmem>>, vector<1x64x128xf32>
    %20 = vector.shape_cast %19 : vector<1x64x128xf32> to vector<64x128xf32>
    %21 = vector.shape_cast %18 : vector<64x128xf32> to vector<1x64x128xf32>
    tpu.vector_store %arg7[%c0_11, %c0_12, %c0_13], %21 {strides = array<i32>} : memref<1x64x128xf32, #tpu.memory_space<vmem>>, vector<1x64x128xf32>,
    return
  }
  func.func @transform_0(%arg0: i32, %arg1: i32) -> (i32, i32, i32) {
    %c0_i32 = arith.constant 0 : i32
    %c0_i32_0 = arith.constant 0 : i32
    return %arg1, %c0_i32, %arg0 : i32, i32, i32
  }
  func.func @transform_1(%arg0: i32, %arg1: i32) -> (i32, i32) {
    %c0_i32 = arith.constant 0 : i32
    %c0_i32_0 = arith.constant 0 : i32
    %c0_i32_1 = arith.constant 0 : i32
    return %c0_i32, %c0_i32_0 : i32, i32
  }
  func.func @transform_2(%arg0: i32, %arg1: i32) -> (i32, i32) {
    %c0_i32 = arith.constant 0 : i32
    %c0_i32_0 = arith.constant 0 : i32
    %c0_i32_1 = arith.constant 0 : i32
    return %c0_i32, %c0_i32_0 : i32, i32
  }
  func.func @transform_3(%arg0: i32, %arg1: i32) -> (i32, i32) {
    %c0_i32 = arith.constant 0 : i32
    %c0_i32_0 = arith.constant 0 : i32
    return %c0_i32, %arg0 : i32, i32
  }
  func.func @transform_4(%arg0: i32, %arg1: i32) -> (i32, i32) {
    %c0_i32 = arith.constant 0 : i32
    %c0_i32_0 = arith.constant 0 : i32
    return %c0_i32, %arg0 : i32, i32
  }
  func.func @transform_5(%arg0: i32, %arg1: i32) -> (i32, i32, i32) {
    %c0_i32 = arith.constant 0 : i32
    %c0_i32_0 = arith.constant 0 : i32
    return %arg1, %c0_i32, %arg0 : i32, i32, i32
  }
}

module attributes {stable_mosaic.version = 11 : i64} {
  func.func @_global_filter_kernel(%arg0: i32, %arg1: i32, %arg2: memref<1x64x128xf32, #tpu.memory_space<vmem>>, %arg3: memref<96x64xbf16, #tpu.memory_space<vmem>>, %arg4: memref<64x96xbf16, #tpu.memory_space<vmem>>, %arg5: memref<48x128xf32, #tpu.memory_space<vmem>>, %arg6: memref<48x128xf32, #tpu.memory_space<vmem>>, %arg7: memref<1x64x128xf32, #tpu.memory_space<vmem>>) attributes {dimension_semantics = [#tpu.dimension_semantics<parallel>, #tpu.dimension_semantics<parallel>], iteration_bounds = array<i64: 1, 2>, scalar_prefetch = 0 : i64, scratch_operands = 0 : i64, tpu.core_type = #tpu.core_type<tc>, window_params = [{transform_indices = @transform_0, window_bounds = array<i64: 1, 64, 128>}, {pipeline_mode = #tpu.pipeline_mode<synchronous>, transform_indices = @transform_1, window_bounds = array<i64: 96, 64>}, {pipeline_mode = #tpu.pipeline_mode<synchronous>, transform_indices = @transform_2, window_bounds = array<i64: 64, 96>}, {transform_indices = @transform_3, window_bounds = array<i64: 48, 128>}, {transform_indices = @transform_4, window_bounds = array<i64: 48, 128>}, {transform_indices = @transform_5, window_bounds = array<i64: 1, 64, 128>}]} {
    %c0 = arith.constant 0 : index
    %c0_0 = arith.constant 0 : index
    %c0_1 = arith.constant 0 : index
    %0 = vector.load %arg2[%c0, %c0_0, %c0_1] : memref<1x64x128xf32, #tpu.memory_space<vmem>>, vector<1x64x128xf32>
    %1 = vector.shape_cast %0 : vector<1x64x128xf32> to vector<64x128xf32>
    %2 = arith.truncf %1 : vector<64x128xf32> to vector<64x128xbf16>
    %c0_2 = arith.constant 0 : index
    %c0_3 = arith.constant 0 : index
    %3 = vector.load %arg3[%c0_2, %c0_3] : memref<96x64xbf16, #tpu.memory_space<vmem>>, vector<96x64xbf16>
    %cst = arith.constant dense<0.000000e+00> : vector<96x128xf32>
    %4 = tpu.matmul %3, %2, %cst {dimension_numbers = #tpu.dot_dimension_numbers<[1], [0], [0], [1], [0, 0, 1, 1], [], []>} : vector<96x64xbf16>, vector<64x128xbf16>, vector<96x128xf32> -> vector<96x128xf32>
    %5 = vector.extract_strided_slice %4 {offsets = [0, 0], sizes = [48, 128], strides = [1, 1]} : vector<96x128xf32> to vector<48x128xf32>
    %6 = vector.extract_strided_slice %4 {offsets = [48, 0], sizes = [48, 128], strides = [1, 1]} : vector<96x128xf32> to vector<48x128xf32>
    %c0_4 = arith.constant 0 : index
    %c0_5 = arith.constant 0 : index
    %7 = vector.load %arg5[%c0_4, %c0_5] : memref<48x128xf32, #tpu.memory_space<vmem>>, vector<48x128xf32>
    %c0_6 = arith.constant 0 : index
    %c0_7 = arith.constant 0 : index
    %8 = vector.load %arg6[%c0_6, %c0_7] : memref<48x128xf32, #tpu.memory_space<vmem>>, vector<48x128xf32>
    %9 = arith.mulf %5, %7 : vector<48x128xf32>
    %10 = arith.mulf %6, %8 : vector<48x128xf32>
    %11 = arith.subf %9, %10 : vector<48x128xf32>
    %12 = arith.mulf %5, %8 : vector<48x128xf32>
    %13 = arith.mulf %6, %7 : vector<48x128xf32>
    %14 = arith.addf %12, %13 : vector<48x128xf32>
    %15 = tpu.concatenate %11, %14 in 0 : vector<48x128xf32>, vector<48x128xf32> -> vector<96x128xf32>
    %16 = arith.truncf %15 : vector<96x128xf32> to vector<96x128xbf16>
    %c0_8 = arith.constant 0 : index
    %c0_9 = arith.constant 0 : index
    %17 = vector.load %arg4[%c0_8, %c0_9] : memref<64x96xbf16, #tpu.memory_space<vmem>>, vector<64x96xbf16>
    %cst_10 = arith.constant dense<0.000000e+00> : vector<64x128xf32>
    %18 = tpu.matmul %17, %16, %cst_10 {dimension_numbers = #tpu.dot_dimension_numbers<[1], [0], [0], [1], [0, 0, 1, 1], [], []>} : vector<64x96xbf16>, vector<96x128xbf16>, vector<64x128xf32> -> vector<64x128xf32>
    %c0_11 = arith.constant 0 : index
    %c0_12 = arith.constant 0 : index
    %c0_13 = arith.constant 0 : index
    %19 = vector.load %arg7[%c0_11, %c0_12, %c0_13] : memref<1x64x128xf32, #tpu.memory_space<vmem>>, vector<1x64x128xf32>
    %20 = vector.shape_cast %19 : vector<1x64x128xf32> to vector<64x128xf32>
    %21 = vector.shape_cast %18 : vector<64x128xf32> to vector<1x64x128xf32>
    tpu.vector_store %arg7[%c0_11, %c0_12, %c0_13], %21 {strides = array<i32>} : memref<1x64x128xf32, #tpu.memory_space<vmem>>, vector<1x64x128xf32>,
    return
  }
  func.func @transform_0(%arg0: i32, %arg1: i32) -> (i32, i32, i32) {
    %c0_i32 = arith.constant 0 : i32
    %c0_i32_0 = arith.constant 0 : i32
    return %arg1, %c0_i32, %arg0 : i32, i32, i32
  }
  func.func @transform_1(%arg0: i32, %arg1: i32) -> (i32, i32) {
    %c0_i32 = arith.constant 0 : i32
    %c0_i32_0 = arith.constant 0 : i32
    %c0_i32_1 = arith.constant 0 : i32
    return %c0_i32, %c0_i32_0 : i32, i32
  }
  func.func @transform_2(%arg0: i32, %arg1: i32) -> (i32, i32) {
    %c0_i32 = arith.constant 0 : i32
    %c0_i32_0 = arith.constant 0 : i32
    %c0_i32_1 = arith.constant 0 : i32
    return %c0_i32, %c0_i32_0 : i32, i32
  }
  func.func @transform_3(%arg0: i32, %arg1: i32) -> (i32, i32) {
    %c0_i32 = arith.constant 0 : i32
    %c0_i32_0 = arith.constant 0 : i32
    return %c0_i32, %arg0 : i32, i32
  }
  func.func @transform_4(%arg0: i32, %arg1: i32) -> (i32, i32) {
    %c0_i32 = arith.constant 0 : i32
    %c0_i32_0 = arith.constant 0 : i32
    return %c0_i32, %arg0 : i32, i32
  }
  func.func @transform_5(%arg0: i32, %arg1: i32) -> (i32, i32, i32) {
    %c0_i32 = arith.constant 0 : i32
    %c0_i32_0 = arith.constant 0 : i32
    return %arg1, %c0_i32, %arg0 : i32, i32, i32
  }
}

</mosaic_0001>

<llo_original>
// kernel: tpu_custom_call.1
$region0: #{tpu_custom_call.1}
  #allocation0 [shape = 'u32[]', space=smem, size = 0x4, offset = 0x4, fixed_abs, tag = 'smem constant byte address 0x4 - core index']
  #allocation1 [shape = 'u32[144,128]{1,0:T(1,128)}', space=vmem, size = 0x12000, scoped, tag = 'internal scratch']
  %s0 = inlined_call_operand.hbm [shape: f32[2,64,128], index: 0, kind: input, shape index: {}]
  %s1 = inlined_call_operand.vmem [shape: bf16[96,64], index: 1, kind: input, shape index: {}]
  %s2 = inlined_call_operand.vmem [shape: bf16[64,96], index: 2, kind: input, shape index: {}]
  %s3 = inlined_call_operand.vmem [shape: f32[48,128], index: 3, kind: input, shape index: {}]
  %s4 = inlined_call_operand.hbm [shape: f32[48,128], index: 4, kind: input, shape index: {}]
  %s5 = inlined_call_operand.hbm [shape: f32[2,64,128], index: 5, kind: output, shape index: {}]
  %s6 = sld [smem:[#allocation0]]
  $region61: #{tpu_custom_call.1} parent=0
    _
  %s8 = ssub.s32 1, %s6
  %s9 = scalar_select 0, %s8, %s6
  $region1: #{tpu_custom_call.1} parent=0
    #allocation2 [shape = 'u8[65536]{0}', space=vmem, size = 0x10000, scoped, tag = 'input window, operand 0']
    #allocation3 [shape = 's32[2]{0}', space=sflag, size = 0x8, scoped, tag = 'scoped memory for tpu_custom_call.1']
    #allocation4 [shape = 's32[2]{0}', space=sflag, size = 0x8, scoped, tag = 'scoped memory for tpu_custom_call.1']
    #allocation5 [shape = 'u8[24576]{0}', space=vmem, size = 0x6000, scoped, tag = 'input window, operand 4, single buffered']
    #allocation6 [shape = 's32[1]{0}', space=sflag, size = 0x4, scoped, tag = 'scoped memory for tpu_custom_call.1']
    #allocation7 [shape = 'u8[65536]{0}', space=vmem, size = 0x10000, scoped, tag = 'output window, operand 0']
    %10 = vsyncpa [#allocation3], 0
    %s11 = scalar_lea.sflag [#allocation3], 1
    %12 = vsyncpa %s11, 0
    %13 = vsyncpa [#allocation6], 0
    %14 = vsyncpa [#allocation4], 0
    %s15 = scalar_lea.sflag [#allocation4], 1
    %16 = vsyncpa %s15, 0
    loop: start=0, step=1, limit=4
    $region2: #{tpu_custom_call.1} parent=1 // loop_pre_header
      _
    $region3: #{tpu_custom_call.1} parent=1 // loop_header
      %s18 = sphi 0, %s22
      %p19 = scmp.ge.s32.totalorder %s18, 4
      %s25 = sphi 0, %s37
      %s26 = sphi 0, %s33
      %s27 = sphi 0, %s25
      %s28 = sphi 0, %s26
      %s29 = sphi 0, %s27
      %s30 = sphi 0, %s28
      %s42 = sphi 0, %s44
      %s45 = sphi 0, %s42
      %s46 = sphi 0, %s45
      %s62 = sphi 0, %s46
      %s66 = sphi 0, %s66
      %s68 = sphi 0, %s66
      %s69 = sphi 0, %s68
      %s83 = sphi 0, %s69
      %s87 = sphi 0, %s87
      %s89 = sphi 0, %s87
      %s90 = sphi 0, %s89
      %s104 = sphi 0, %s90
      %s110 = sphi 0, %s112
      %s113 = sphi 0, %s110
      %s114 = sphi 0, %s113
      %s130 = sphi 0, %s114
      %s136 = sphi 0, %s138
      %s139 = sphi 0, %s136
      %s140 = sphi 0, %s139
      %s156 = sphi 0, %s140
      %s164 = sphi 0, %s166
      %s167 = sphi 0, %s164
      %s168 = sphi 0, %s167
      %s184 = sphi 0, %s168
    $region4: #{tpu_custom_call.1} parent=1 // loop_header_branch
      %21 = sbr.rel (%p19) target = $region8
    $region5: #{tpu_custom_call.1} parent=1 // loop_body
      %s23 = ssub.s32 %s18, 1
      %s24 = ssub.s32 %s18, 2
      %s31 = sadd.s32 1, %s26
      %p32 = scmp.ge.s32.totalorder %s31, 2
      %s33 = scalar_select %p32, 0, %s31
      %s34 = sadd.s32 1, %s25
      %s35 = scalar_select %p32, %s34, %s25
      %p36 = scmp.ge.s32.totalorder %s35, 1
      %s37 = scalar_select %p36, 0, %s35
      %s38 = ssub.s32 %s26, %s33
      %s39 = ssub.s32 %s25, %s37
      %s40 = sor.u32 %s38, %s39
      %p41 = scmp.eq.s32.totalorder %s40, 0
      %s43 = sadd.s32 %s42, 1
      %s44 = scalar_select %p41, %s42, %s43
      %p47 = pneg %p41
      %p48 = scmp.eq.s32.totalorder %s18, 1
      %p49 = por %p47, %p48
      %p50 = scmp.ne.s32.totalorder %s42, %s45
      %p51 = scmp.eq.s32.totalorder %s18, 0
      %p52 = por %p50, %p51
      %p53 = scmp.ne.s32.totalorder %s42, %s45
      %p54 = scmp.eq.s32.totalorder %s23, 1
      %p55 = por %p53, %p54
      %p56 = scmp.ne.s32.totalorder %s45, %s46
      %p57 = scmp.eq.s32.totalorder %s23, 0
      %p58 = por %p56, %p57
      %p59 = scmp.ne.s32.totalorder %s45, %s46
      %p60 = scmp.eq.s32.totalorder %s24, 1
      %p61 = por %p59, %p60
      %p63 = scmp.ne.s32.totalorder %s46, %s62
      %p64 = scmp.eq.s32.totalorder %s24, 0
      %p65 = por %p63, %p64
      %s67 = sadd.s32 %s66, 1
      %p70 = scmp.eq.s32.totalorder %s18, 1
      %p71 = scmp.ne.s32.totalorder %s66, %s68
      %p72 = scmp.eq.s32.totalorder %s18, 0
      %p73 = por %p71, %p72
      %p74 = scmp.ne.s32.totalorder %s66, %s68
      %p75 = scmp.eq.s32.totalorder %s23, 1
      %p76 = por %p74, %p75
      %p77 = scmp.ne.s32.totalorder %s68, %s69
      %p78 = scmp.eq.s32.totalorder %s23, 0
      %p79 = por %p77, %p78
      %p80 = scmp.ne.s32.totalorder %s68, %s69
      %p81 = scmp.eq.s32.totalorder %s24, 1
      %p82 = por %p80, %p81
      %p84 = scmp.ne.s32.totalorder %s69, %s83
      %p85 = scmp.eq.s32.totalorder %s24, 0
      %p86 = por %p84, %p85
      %s88 = sadd.s32 %s87, 1
      %p91 = scmp.eq.s32.totalorder %s18, 1
      %p92 = scmp.ne.s32.totalorder %s87, %s89
      %p93 = scmp.eq.s32.totalorder %s18, 0
      %p94 = por %p92, %p93
      %p95 = scmp.ne.s32.totalorder %s87, %s89
      %p96 = scmp.eq.s32.totalorder %s23, 1
      %p97 = por %p95, %p96
      %p98 = scmp.ne.s32.totalorder %s89, %s90
      %p99 = scmp.eq.s32.totalorder %s23, 0
      %p100 = por %p98, %p99
      %p101 = scmp.ne.s32.totalorder %s89, %s90
      %p102 = scmp.eq.s32.totalorder %s24, 1
      %p103 = por %p101, %p102
      %p105 = scmp.ne.s32.totalorder %s90, %s104
      %p106 = scmp.eq.s32.totalorder %s24, 0
      %p107 = por %p105, %p106
      %s108 = ssub.s32 %s25, %s37
      %p109 = scmp.eq.s32.totalorder %s108, 0
      %s111 = sadd.s32 %s110, 1
      %s112 = scalar_select %p109, %s110, %s111
      %p115 = pneg %p109
      %p116 = scmp.eq.s32.totalorder %s18, 1
      %p117 = por %p115, %p116
      %p118 = scmp.ne.s32.totalorder %s110, %s113
      %p119 = scmp.eq.s32.totalorder %s18, 0
      %p120 = por %p118, %p119
      %p121 = scmp.ne.s32.totalorder %s110, %s113
      %p122 = scmp.eq.s32.totalorder %s23, 1
      %p123 = por %p121, %p122
      %p124 = scmp.ne.s32.totalorder %s113, %s114
      %p125 = scmp.eq.s32.totalorder %s23, 0
      %p126 = por %p124, %p125
      %p127 = scmp.ne.s32.totalorder %s113, %s114
      %p128 = scmp.eq.s32.totalorder %s24, 1
      %p129 = por %p127, %p128
      %p131 = scmp.ne.s32.totalorder %s114, %s130
      %p132 = scmp.eq.s32.totalorder %s24, 0
      %p133 = por %p131, %p132
      %s134 = ssub.s32 %s25, %s37
      %p135 = scmp.eq.s32.totalorder %s134, 0
      %s137 = sadd.s32 %s136, 1
      %s138 = scalar_select %p135, %s136, %s137
      %p141 = pneg %p135
      %p142 = scmp.eq.s32.totalorder %s18, 1
      %p143 = por %p141, %p142
      %p144 = scmp.ne.s32.totalorder %s136, %s139
      %p145 = scmp.eq.s32.totalorder %s18, 0
      %p146 = por %p144, %p145
      %p147 = scmp.ne.s32.totalorder %s136, %s139
      %p148 = scmp.eq.s32.totalorder %s23, 1
      %p149 = por %p147, %p148
      %p150 = scmp.ne.s32.totalorder %s139, %s140
      %p151 = scmp.eq.s32.totalorder %s23, 0
      %p152 = por %p150, %p151
      %p153 = scmp.ne.s32.totalorder %s139, %s140
      %p154 = scmp.eq.s32.totalorder %s24, 1
      %p155 = por %p153, %p154
      %p157 = scmp.ne.s32.totalorder %s140, %s156
      %p158 = scmp.eq.s32.totalorder %s24, 0
      %p159 = por %p157, %p158
      %s160 = ssub.s32 %s26, %s33
      %s161 = ssub.s32 %s25, %s37
      %s162 = sor.u32 %s160, %s161
      %p163 = scmp.eq.s32.totalorder %s162, 0
      %s165 = sadd.s32 %s164, 1
      %s166 = scalar_select %p163, %s164, %s165
      %p169 = pneg %p163
      %p170 = scmp.eq.s32.totalorder %s18, 1
      %p171 = por %p169, %p170
      %p172 = scmp.ne.s32.totalorder %s164, %s167
      %p173 = scmp.eq.s32.totalorder %s18, 0
      %p174 = por %p172, %p173
      %p175 = scmp.ne.s32.totalorder %s164, %s167
      %p176 = scmp.eq.s32.totalorder %s23, 1
      %p177 = por %p175, %p176
      %p178 = scmp.ne.s32.totalorder %s167, %s168
      %p179 = scmp.eq.s32.totalorder %s23, 0
      %p180 = por %p178, %p179
      %p181 = scmp.ne.s32.totalorder %s167, %s168
      %p182 = scmp.eq.s32.totalorder %s24, 1
      %p183 = por %p181, %p182
      %p185 = scmp.ne.s32.totalorder %s168, %s184
      %p186 = scmp.eq.s32.totalorder %s24, 0
      %p187 = por %p185, %p186
      %p188 = scmp.le.s32.totalorder 1, %s18
      %p189 = scmp.lt.s32.totalorder %s18, 3
      %p190 = pnand %p188, %p189
      %p191 = pneg %p190
      // Predicated region
      $region9: #{tpu_custom_call.1} parent=5 // pred_check
        _
      $region10: #{tpu_custom_call.1} parent=5 // pred_check_branch
        %193 = sbr.rel (%p190) target = $region12
      $region11: #{tpu_custom_call.1} parent=5 // pred_region
        %s194 = ssub.s32 %s18, 1
        // Predicated region
        $region13: #{tpu_custom_call.1} parent=11 // pred_check
          %p195 = pneg %p79
        $region14: #{tpu_custom_call.1} parent=11 // pred_check_branch
          %197 = sbr.rel (%p195) target = $region16
        $region15: #{tpu_custom_call.1} parent=11 // pred_region
          _
        $region16: #{tpu_custom_call.1} parent=11 // pred_fallthru
          _
        // Predicated region
        $region17: #{tpu_custom_call.1} parent=11 // pred_check
          %p198 = pneg %p100
        $region18: #{tpu_custom_call.1} parent=11 // pred_check_branch
          %200 = sbr.rel (%p198) target = $region20
        $region19: #{tpu_custom_call.1} parent=11 // pred_region
          _
        $region20: #{tpu_custom_call.1} parent=11 // pred_fallthru
          _
        // Predicated region
        $region21: #{tpu_custom_call.1} parent=11 // pred_check
          %p201 = pneg %p126
        $region22: #{tpu_custom_call.1} parent=11 // pred_check_branch
          %203 = sbr.rel (%p201) target = $region24
        $region23: #{tpu_custom_call.1} parent=11 // pred_region
          %p204 = scmp.lt.s32.totalorder %s27, 0
          %s205 = scalar_select %p204, %s27, 0
          %s206 = smul.addr %s205, 8
          %s207 = scalar_lea.vmem %s3, %s206
        $region24: #{tpu_custom_call.1} parent=11 // pred_fallthru
          _
        // Predicated region
        $region25: #{tpu_custom_call.1} parent=11 // pred_check
          %p208 = pneg %p152
        $region26: #{tpu_custom_call.1} parent=11 // pred_check_branch
          %210 = sbr.rel (%p208) target = $region28
        $region27: #{tpu_custom_call.1} parent=11 // pred_region
          %s212 = ssub.s32 768, 768
          %213 = vsyncadd [#allocation6], %s212
          %s214 = smul.addr %s27, 128
          %s215 = scalar_lea.hbm %s4, %s214
          %s216 = sshll.u32 [#allocation5], 4
          %s217 = int_to_ptr.vmem [resolvable:$true] %s216
          %222 = dma.hbm_to_vmem [thread:$0]  %s215, 768, %s217, [#allocation6], 128, 128, 8
        $region28: #{tpu_custom_call.1} parent=11 // pred_fallthru
          _
      $region12: #{tpu_custom_call.1} parent=5 // pred_fallthru
        _
      %p223 = scmp.lt.s32.totalorder %s18, 2
      // Predicated region
      $region29: #{tpu_custom_call.1} parent=5 // pred_check
        %p224 = pneg %p223
      $region30: #{tpu_custom_call.1} parent=5 // pred_check_branch
        %226 = sbr.rel (%p224) target = $region32
      $region31: #{tpu_custom_call.1} parent=5 // pred_region
        // Predicated region
        $region33: #{tpu_custom_call.1} parent=31 // pred_check
          %p227 = pneg %p52
        $region34: #{tpu_custom_call.1} parent=31 // pred_check_branch
          %229 = sbr.rel (%p227) target = $region36
        $region35: #{tpu_custom_call.1} parent=31 // pred_region
          %s230 = sand.u32 %s42, 1
          %s231 = scalar_lea.sflag [#allocation3], %s230
          %s232 = sand.u32 %s42, 1
          %s233 = smul.addr %s232, 64
          %s234 = scalar_lea.vmem [#allocation2], %s233
          %s236 = ssub.s32 1024, 1024
          %237 = vsyncadd %s231, %s236
          %s238 = smul.addr %s26, 8
          %s239 = sadd.s32 %s25, %s238
          %s240 = smul.addr %s239, 128
          %s241 = scalar_lea.hbm %s0, %s240
          %s242 = sshll.u32 %s234, 4
          %s243 = int_to_ptr.vmem [resolvable:$true] %s242
          %248 = dma.hbm_to_vmem [thread:$0]  %s241, 1024, %s243, %s231, 128, 128, 8
        $region36: #{tpu_custom_call.1} parent=31 // pred_fallthru
          _
      $region32: #{tpu_custom_call.1} parent=5 // pred_fallthru
        _
      %p249 = scmp.le.s32.totalorder 1, %s18
      %p250 = scmp.lt.s32.totalorder %s18, 3
      %p251 = pnand %p249, %p250
      %p252 = pneg %p251
      // Predicated region
      $region37: #{tpu_custom_call.1} parent=5 // pred_check
        _
      $region38: #{tpu_custom_call.1} parent=5 // pred_check_branch
        %254 = sbr.rel (%p251) target = $region40
      $region39: #{tpu_custom_call.1} parent=5 // pred_region
        %s255 = ssub.s32 %s18, 1
        %s256 = sand.u32 %s45, 1
        %s257 = scalar_lea.sflag [#allocation3], %s256
        %s258 = sand.u32 %s45, 1
        %s259 = smul.addr %s258, 64
        %s260 = scalar_lea.vmem [#allocation2], %s259
        // Predicated region
        $region41: #{tpu_custom_call.1} parent=39 // pred_check
          %p261 = pneg %p58
        $region42: #{tpu_custom_call.1} parent=39 // pred_check_branch
          %263 = sbr.rel (%p261) target = $region44
        $region43: #{tpu_custom_call.1} parent=39 // pred_region
          %264 = dma.done %s257, 1024
        $region44: #{tpu_custom_call.1} parent=39 // pred_fallthru
          _
        // Predicated region
        $region45: #{tpu_custom_call.1} parent=39 // pred_check
          %p265 = pneg %p152
        $region46: #{tpu_custom_call.1} parent=39 // pred_check_branch
          %267 = sbr.rel (%p265) target = $region48
        $region47: #{tpu_custom_call.1} parent=39 // pred_region
          %268 = dma.done [#allocation6], 768
        $region48: #{tpu_custom_call.1} parent=39 // pred_fallthru
          _
        %s269 = sand.u32 %s45, 1
        %s270 = scalar_lea.sflag [#allocation3], %s269
        %s271 = sand.u32 %s45, 1
        %s272 = smul.addr %s271, 64
        %s273 = scalar_lea.vmem [#allocation2], %s272
        %p274 = pneg %p58
        %p275 = pneg %p55
        %p276 = pneg %p79
        %p277 = pneg %p76
        %p278 = pneg %p100
        %p279 = pneg %p97
        %p280 = scmp.lt.s32.totalorder %s27, 0
        %s281 = scalar_select %p280, %s27, 0
        %s282 = smul.addr %s281, 8
        %s283 = scalar_lea.vmem %s3, %s282
        %p284 = pneg %p126
        %p285 = pneg %p123
        %p286 = pneg %p152
        %p287 = pneg %p149
        %p288 = pneg %p180
        %p289 = pneg %p177
        %s290 = sand.u32 %s167, 1
        %s291 = scalar_lea.sflag [#allocation4], %s290
        %s292 = sand.u32 %s167, 1
        %s293 = smul.addr %s292, 64
        %s294 = scalar_lea.vmem [#allocation7], %s293
        %p295 = scmp.lt.s32.totalorder %s27, 0
        %s296 = scalar_select %p295, %s27, 0
        %s297 = smul.addr %s296, 8
        %s298 = scalar_lea.vmem %s3, %s297
        %v300 = vld [vmem:[%s260] sm:$0xff]
        %v301 = vld [vmem:[%s260 + $0x8] sm:$0xff]
        %v302 = vld [vmem:[%s260 + $0x10] sm:$0xff]
        %v303 = vld [vmem:[%s260 + $0x18] sm:$0xff]
        %v304 = vld [vmem:[%s260 + $0x20] sm:$0xff]
        %v305 = vld [vmem:[%s260 + $0x28] sm:$0xff]
        %v306 = vld [vmem:[%s260 + $0x30] sm:$0xff]
        %v307 = vld [vmem:[%s260 + $0x38] sm:$0xff]
        %v308 = vpack.c.bf16 %v301, %v300
        %v309 = vpack.c.bf16 %v303, %v302
        %v310 = vpack.c.bf16 %v305, %v304
        %v311 = vpack.c.bf16 %v307, %v306
        %v312 = vld [vmem:[%s1] sm:$0xf]
        %v313 = vld [vmem:[%s1 + $0x4] sm:$0xf]
        %v314 = vld [vmem:[%s1 + $0x8] sm:$0xf]
        %v315 = vld [vmem:[%s1 + $0xc] sm:$0xf]
        %v316 = vld [vmem:[%s1 + $0x10] sm:$0xf]
        %v317 = vld [vmem:[%s1 + $0x14] sm:$0xf]
        %v318 = vld [vmem:[%s1 + $0x18] sm:$0xf]
        %v319 = vld [vmem:[%s1 + $0x1c] sm:$0xf]
        %v320 = vld [vmem:[%s1 + $0x20] sm:$0xf]
        %v321 = vld [vmem:[%s1 + $0x24] sm:$0xf]
        %v322 = vld [vmem:[%s1 + $0x28] sm:$0xf]
        %v323 = vld [vmem:[%s1 + $0x2c] sm:$0xf]
        %v336 = vunpack.c.l.b16 %v312
        %v337 = vunpack.c.l.b16 %v313
        %v338 = vunpack.c.l.b16 %v314
        %v339 = vunpack.c.l.b16 %v315
        %v340 = vunpack.c.l.b16 %v316
        %v341 = vunpack.c.l.b16 %v317
        %v342 = vunpack.c.l.b16 %v318
        %v343 = vunpack.c.l.b16 %v319
        %v344 = vunpack.c.l.b16 %v320
        %v345 = vunpack.c.l.b16 %v321
        %v346 = vunpack.c.l.b16 %v322
        %v347 = vunpack.c.l.b16 %v323
        %v348 = vpack.c.b16 %v337, %v336
        %v349 = vpack.c.b16 %v339, %v338
        %v350 = vpack.c.b16 %v341, %v340
        %v351 = vpack.c.b16 %v343, %v342
        %v352 = vpack.c.b16 %v345, %v344
        %v353 = vpack.c.b16 %v347, %v346
        %vm354 = vcmask 523264
        %v356 = vsel %vm354, %v348, 0
        %v359 = vsel %vm354, %v349, 0
        %v362 = vsel %vm354, %v350, 0
        %v365 = vsel %vm354, %v351, 0
        %v368 = vsel %vm354, %v352, 0
        %v371 = vsel %vm354, %v353, 0
        %373 = vmatprep.subr.bf16.mxu0 0
        %374 = vmatpush1.bf16.msra.mxu0 %v308
        %375 = vmatprep.subr.bf16.mxu0 0
        %376 = vmatpush1.bf16.msra.mxu0 %v309
        %377 = vmatprep.subr.bf16.mxu0 0
        %378 = vmatpush1.bf16.msra.mxu0 %v310
        %379 = vmatprep.subr.bf16.mxu0 0
        %380 = vmatpush1.bf16.msra.mxu0 %v311
        %381 = vmatprep.subr.bf16.mxu0 0
        %382 = vmatpush1.bf16.msra.mxu0 0
        %383 = vmatprep.subr.bf16.mxu0 0
        %384 = vmatpush1.bf16.msra.mxu0 0
        %385 = vmatprep.subr.bf16.mxu0 0
        %386 = vmatpush1.bf16.msra.mxu0 0
        %387 = vmatprep.subr.bf16.mxu0 0
        %388 = vmatpush1.bf16.msra.mxu0 0
        %389 = vmatprep.subr.bf16.mxu0 0
        %390 = vmatpush1.bf16.msra.mxu0 0
        %391 = vmatprep.subr.bf16.mxu0 0
        %392 = vmatpush1.bf16.msra.mxu0 0
        %393 = vmatprep.subr.bf16.mxu0 0
        %394 = vmatpush1.bf16.msra.mxu0 0
        %395 = vmatprep.subr.bf16.mxu0 0
        %396 = vmatpush1.bf16.msra.mxu0 0
        %397 = vmatprep.subr.bf16.mxu0 0
        %398 = vmatpush1.bf16.msra.mxu0 0
        %399 = vmatprep.subr.bf16.mxu0 0
        %400 = vmatpush1.bf16.msra.mxu0 0
        %401 = vmatprep.subr.bf16.mxu0 0
        %402 = vmatpush1.bf16.msra.mxu0 0
        %403 = vmatprep.subr.bf16.mxu0 0
        %404 = vmatpush1.bf16.msra.mxu0 0
        %405 = vmatprep.mubr.bf16.mxu0 0
        %406 = vmatmul.mubr.bf16.gmra.mrb[0].mxu0 %v356
        %v407 = vpop.f32.mrb[0].mxu0
        %v408 = vadd.f32 0.0, %v407
        %v409 = vpop.f32.mrb[0].mxu0
        %v410 = vpop.f32.mrb[0].mxu0
        %v411 = vadd.f32 0.0, %v410
        %v412 = vpop.f32.mrb[0].mxu0
        %413 = vmatprep.mubr.bf16.mxu0 0
        %414 = vmatmul.mubr.bf16.gmra.mrb[0].mxu0 %v359
        %v415 = vpop.f32.mrb[0].mxu0
        %v416 = vadd.f32 0.0, %v415
        %v417 = vpop.f32.mrb[0].mxu0
        %v418 = vpop.f32.mrb[0].mxu0
        %v419 = vadd.f32 0.0, %v418
        %v420 = vpop.f32.mrb[0].mxu0
        %421 = vmatprep.mubr.bf16.mxu0 0
        %422 = vmatmul.mubr.bf16.gmra.mrb[0].mxu0 %v362
        %v423 = vpop.f32.mrb[0].mxu0
        %v424 = vadd.f32 0.0, %v423
        %v425 = vpop.f32.mrb[0].mxu0
        %v426 = vpop.f32.mrb[0].mxu0
        %v427 = vadd.f32 0.0, %v426
        %v428 = vpop.f32.mrb[0].mxu0
        %429 = vmatprep.mubr.bf16.mxu0 0
        %430 = vmatmul.mubr.bf16.gmra.mrb[0].mxu0 %v365
        %v431 = vpop.f32.mrb[0].mxu0
        %v432 = vadd.f32 0.0, %v431
        %v433 = vpop.f32.mrb[0].mxu0
        %v434 = vpop.f32.mrb[0].mxu0
        %v435 = vadd.f32 0.0, %v434
        %v436 = vpop.f32.mrb[0].mxu0
        %437 = vmatprep.mubr.bf16.mxu0 0
        %438 = vmatmul.mubr.bf16.gmra.mrb[0].mxu0 %v368
        %v439 = vpop.f32.mrb[0].mxu0
        %v440 = vadd.f32 0.0, %v439
        %v441 = vpop.f32.mrb[0].mxu0
        %v442 = vpop.f32.mrb[0].mxu0
        %v443 = vadd.f32 0.0, %v442
        %v444 = vpop.f32.mrb[0].mxu0
        %445 = vmatprep.mubr.bf16.mxu0 0
        %446 = vmatmul.mubr.bf16.gmra.mrb[0].mxu0 %v371
        %v447 = vpop.f32.mrb[0].mxu0
        %v448 = vadd.f32 0.0, %v447
        %v449 = vpop.f32.mrb[0].mxu0
        %v450 = vpop.f32.mrb[0].mxu0
        %v451 = vadd.f32 0.0, %v450
        %v452 = vpop.f32.mrb[0].mxu0
        %453 = vdwg.mxu0
        %v454 = vld [vmem:[%s298] sm:$0xff]
        %v455 = vld [vmem:[%s298 + $0x8] sm:$0xff]
        %v456 = vld [vmem:[%s298 + $0x10] sm:$0xff]
        %v457 = vld [vmem:[%s298 + $0x18] sm:$0xff]
        %v458 = vld [vmem:[%s298 + $0x20] sm:$0xff]
        %v459 = vld [vmem:[%s298 + $0x28] sm:$0xff]
        %v460 = vld [vmem:[#allocation5] sm:$0xff]
        %v461 = vld [vmem:[#allocation5 + $0x8] sm:$0xff]
        %v462 = vld [vmem:[#allocation5 + $0x10] sm:$0xff]
        %v463 = vld [vmem:[#allocation5 + $0x18] sm:$0xff]
        %v464 = vld [vmem:[#allocation5 + $0x20] sm:$0xff]
        %v465 = vld [vmem:[#allocation5 + $0x28] sm:$0xff]
        %v466 = vmul.f32 %v408, %v454
        %v467 = vmul.f32 %v411, %v455
        %v468 = vmul.f32 %v416, %v456
        %v469 = vmul.f32 %v419, %v457
        %v470 = vmul.f32 %v424, %v458
        %v471 = vmul.f32 %v427, %v459
        %v472 = vmul.f32 %v432, %v460
        %v473 = vmul.f32 %v435, %v461
        %v474 = vmul.f32 %v440, %v462
        %v475 = vmul.f32 %v443, %v463
        %v476 = vmul.f32 %v448, %v464
        %v477 = vmul.f32 %v451, %v465
        %v478 = vsub.f32 %v466, %v472
        %v479 = vsub.f32 %v467, %v473
        %v480 = vsub.f32 %v468, %v474
        %v481 = vsub.f32 %v469, %v475
        %v482 = vsub.f32 %v470, %v476
        %v483 = vsub.f32 %v471, %v477
        %v484 = vmul.f32 %v408, %v460
        %v485 = vmul.f32 %v411, %v461
        %v486 = vmul.f32 %v416, %v462
        %v487 = vmul.f32 %v419, %v463
        %v488 = vmul.f32 %v424, %v464
        %v489 = vmul.f32 %v427, %v465
        %v490 = vmul.f32 %v432, %v454
        %v491 = vmul.f32 %v435, %v455
        %v492 = vmul.f32 %v440, %v456
        %v493 = vmul.f32 %v443, %v457
        %v494 = vmul.f32 %v448, %v458
        %v495 = vmul.f32 %v451, %v459
        %v496 = vadd.f32 %v484, %v490
        %v497 = vadd.f32 %v485, %v491
        %v498 = vadd.f32 %v486, %v492
        %v499 = vadd.f32 %v487, %v493
        %v500 = vadd.f32 %v488, %v494
        %v501 = vadd.f32 %v489, %v495
        %v502 = vpack.c.bf16 %v479, %v478
        %v503 = vpack.c.bf16 %v481, %v480
        %v504 = vpack.c.bf16 %v483, %v482
        %v505 = vpack.c.bf16 %v497, %v496
        %v506 = vpack.c.bf16 %v499, %v498
        %v507 = vpack.c.bf16 %v501, %v500
        %v508 = vld [vmem:[%s2] sm:$0xf]
        %v509 = vld [vmem:[%s2 + $0x4] sm:$0xf]
        %v510 = vld [vmem:[%s2 + $0x8] sm:$0xf]
        %v511 = vld [vmem:[%s2 + $0xc] sm:$0xf]
        %v512 = vld [vmem:[%s2 + $0x10] sm:$0xf]
        %v513 = vld [vmem:[%s2 + $0x14] sm:$0xf]
        %v514 = vld [vmem:[%s2 + $0x18] sm:$0xf]
        %v515 = vld [vmem:[%s2 + $0x1c] sm:$0xf]
        %v524 = vunpack.c.l.b16 %v508
        %v525 = vunpack.c.l.b16 %v509
        %v526 = vunpack.c.l.b16 %v510
        %v527 = vunpack.c.l.b16 %v511
        %v528 = vunpack.c.l.b16 %v512
        %v529 = vunpack.c.l.b16 %v513
        %v530 = vunpack.c.l.b16 %v514
        %v531 = vunpack.c.l.b16 %v515
        %v532 = vpack.c.b16 %v525, %v524
        %v533 = vpack.c.b16 %v527, %v526
        %v534 = vpack.c.b16 %v529, %v528
        %v535 = vpack.c.b16 %v531, %v530
        %vm536 = vcmask 785408
        %v538 = vsel %vm536, %v532, 0
        %v541 = vsel %vm536, %v533, 0
        %v544 = vsel %vm536, %v534, 0
        %v547 = vsel %vm536, %v535, 0
        %549 = vmatprep.subr.bf16.mxu0 0
        %550 = vmatpush1.bf16.msra.mxu0 %v502
        %551 = vmatprep.subr.bf16.mxu0 0
        %552 = vmatpush1.bf16.msra.mxu0 %v503
        %553 = vmatprep.subr.bf16.mxu0 0
        %554 = vmatpush1.bf16.msra.mxu0 %v504
        %555 = vmatprep.subr.bf16.mxu0 0
        %556 = vmatpush1.bf16.msra.mxu0 %v505
        %557 = vmatprep.subr.bf16.mxu0 0
        %558 = vmatpush1.bf16.msra.mxu0 %v506
        %559 = vmatprep.subr.bf16.mxu0 0
        %560 = vmatpush1.bf16.msra.mxu0 %v507
        %561 = vmatprep.subr.bf16.mxu0 0
        %562 = vmatpush1.bf16.msra.mxu0 0
        %563 = vmatprep.subr.bf16.mxu0 0
        %564 = vmatpush1.bf16.msra.mxu0 0
        %565 = vmatprep.subr.bf16.mxu0 0
        %566 = vmatpush1.bf16.msra.mxu0 0
        %567 = vmatprep.subr.bf16.mxu0 0
        %568 = vmatpush1.bf16.msra.mxu0 0
        %569 = vmatprep.subr.bf16.mxu0 0
        %570 = vmatpush1.bf16.msra.mxu0 0
        %571 = vmatprep.subr.bf16.mxu0 0
        %572 = vmatpush1.bf16.msra.mxu0 0
        %573 = vmatprep.subr.bf16.mxu0 0
        %574 = vmatpush1.bf16.msra.mxu0 0
        %575 = vmatprep.subr.bf16.mxu0 0
        %576 = vmatpush1.bf16.msra.mxu0 0
        %577 = vmatprep.subr.bf16.mxu0 0
        %578 = vmatpush1.bf16.msra.mxu0 0
        %579 = vmatprep.subr.bf16.mxu0 0
        %580 = vmatpush1.bf16.msra.mxu0 0
        %581 = vmatprep.mubr.bf16.mxu0 0
        %582 = vmatmul.mubr.bf16.gmra.mrb[0].mxu0 %v538
        %v583 = vpop.f32.mrb[0].mxu0
        %v584 = vadd.f32 0.0, %v583
        %v585 = vpop.f32.mrb[0].mxu0
        %v586 = vpop.f32.mrb[0].mxu0
        %v587 = vadd.f32 0.0, %v586
        %v588 = vpop.f32.mrb[0].mxu0
        %589 = vmatprep.mubr.bf16.mxu0 0
        %590 = vmatmul.mubr.bf16.gmra.mrb[0].mxu0 %v541
        %v591 = vpop.f32.mrb[0].mxu0
        %v592 = vadd.f32 0.0, %v591
        %v593 = vpop.f32.mrb[0].mxu0
        %v594 = vpop.f32.mrb[0].mxu0
        %v595 = vadd.f32 0.0, %v594
        %v596 = vpop.f32.mrb[0].mxu0
        %597 = vmatprep.mubr.bf16.mxu0 0
        %598 = vmatmul.mubr.bf16.gmra.mrb[0].mxu0 %v544
        %v599 = vpop.f32.mrb[0].mxu0
        %v600 = vadd.f32 0.0, %v599
        %v601 = vpop.f32.mrb[0].mxu0
        %v602 = vpop.f32.mrb[0].mxu0
        %v603 = vadd.f32 0.0, %v602
        %v604 = vpop.f32.mrb[0].mxu0
        %605 = vmatprep.mubr.bf16.mxu0 0
        %606 = vmatmul.mubr.bf16.gmra.mrb[0].mxu0 %v547
        %v607 = vpop.f32.mrb[0].mxu0
        %v608 = vadd.f32 0.0, %v607
        %v609 = vpop.f32.mrb[0].mxu0
        %v610 = vpop.f32.mrb[0].mxu0
        %v611 = vadd.f32 0.0, %v610
        %v612 = vpop.f32.mrb[0].mxu0
        %613 = vdwg.mxu0
        %614 = vst [vmem:[%s294] sm:$0xff] %v584
        %615 = vst [vmem:[%s294 + $0x8] sm:$0xff] %v587
        %616 = vst [vmem:[%s294 + $0x10] sm:$0xff] %v592
        %617 = vst [vmem:[%s294 + $0x18] sm:$0xff] %v595
        %618 = vst [vmem:[%s294 + $0x20] sm:$0xff] %v600
        %619 = vst [vmem:[%s294 + $0x28] sm:$0xff] %v603
        %620 = vst [vmem:[%s294 + $0x30] sm:$0xff] %v608
        %621 = vst [vmem:[%s294 + $0x38] sm:$0xff] %v611
        %s622 = sand.u32 %s167, 1
        %s623 = scalar_lea.sflag [#allocation4], %s622
        %s624 = sand.u32 %s167, 1
        %s625 = smul.addr %s624, 64
        %s626 = scalar_lea.vmem [#allocation7], %s625
        // Predicated region
        $region49: #{tpu_custom_call.1} parent=39 // pred_check
          %p627 = pneg %p177
        $region50: #{tpu_custom_call.1} parent=39 // pred_check_branch
          %629 = sbr.rel (%p627) target = $region52
        $region51: #{tpu_custom_call.1} parent=39 // pred_region
          %s631 = ssub.s32 1024, 1024
          %632 = vsyncadd %s623, %s631
          %s633 = smul.addr %s28, 8
          %s634 = sadd.s32 %s27, %s633
          %s635 = smul.addr %s634, 128
          %s636 = scalar_lea.hbm %s5, %s635
          %s637 = sshll.u32 %s626, 4
          %s638 = int_to_ptr.vmem [resolvable:$true] %s637
          %643 = dma.vmem_to_hbm [thread:$0]  %s638, 1024, %s636, %s623, 128, 128, 8
        $region52: #{tpu_custom_call.1} parent=39 // pred_fallthru
          _
      $region40: #{tpu_custom_call.1} parent=5 // pred_fallthru
        _
      %p644 = scmp.le.s32.totalorder 2, %s18
      // Predicated region
      $region53: #{tpu_custom_call.1} parent=5 // pred_check
        %p645 = pneg %p644
      $region54: #{tpu_custom_call.1} parent=5 // pred_check_branch
        %647 = sbr.rel (%p645) target = $region56
      $region55: #{tpu_custom_call.1} parent=5 // pred_region
        %s648 = ssub.s32 %s18, 2
        // Predicated region
        $region57: #{tpu_custom_call.1} parent=55 // pred_check
          %p649 = pneg %p183
        $region58: #{tpu_custom_call.1} parent=55 // pred_check_branch
          %651 = sbr.rel (%p649) target = $region60
        $region59: #{tpu_custom_call.1} parent=55 // pred_region
          %s652 = sand.u32 %s168, 1
          %s653 = scalar_lea.sflag [#allocation4], %s652
          %s654 = sand.u32 %s168, 1
          %s655 = smul.addr %s654, 64
          %s656 = scalar_lea.vmem [#allocation7], %s655
          %657 = dma.done %s653, 1024
        $region60: #{tpu_custom_call.1} parent=55 // pred_fallthru
          _
      $region56: #{tpu_custom_call.1} parent=5 // pred_fallthru
        _
    $region6: #{tpu_custom_call.1} parent=1 // loop_footer
      %s22 = sadd.s32 1, %s18
    $region7: #{tpu_custom_call.1} parent=1 // loop_footer_branch
      %17 = sbr.rel target = $region3
    $region8: #{tpu_custom_call.1} parent=1 // loop_exit
      _
    %658 = vsyncpa [#allocation3], 1
    %s659 = scalar_lea.sflag [#allocation3], 1
    %660 = vsyncpa %s659, 1
    %661 = vsyncpa [#allocation6], 1
    %662 = vsyncpa [#allocation4], 1
    %s663 = scalar_lea.sflag [#allocation4], 1
    %664 = vsyncpa %s663, 1

// kernel: tpu_custom_call.1
$region0: #{tpu_custom_call.1}
  #allocation0 [shape = 'u32[]', space=smem, size = 0x4, offset = 0x4, fixed_abs, tag = 'smem constant byte address 0x4 - core index']
  #allocation1 [shape = 'u32[144,128]{1,0:T(1,128)}', space=vmem, size = 0x12000, scoped, tag = 'internal scratch']
  %s0 = inlined_call_operand.hbm [shape: f32[2,64,128], index: 0, kind: input, shape index: {}]
  %s1 = inlined_call_operand.vmem [shape: bf16[96,64], index: 1, kind: input, shape index: {}]
  %s2 = inlined_call_operand.vmem [shape: bf16[64,96], index: 2, kind: input, shape index: {}]
  %s3 = inlined_call_operand.vmem [shape: f32[48,128], index: 3, kind: input, shape index: {}]
  %s4 = inlined_call_operand.hbm [shape: f32[48,128], index: 4, kind: input, shape index: {}]
  %s5 = inlined_call_operand.hbm [shape: f32[2,64,128], index: 5, kind: output, shape index: {}]
  %s6 = sld [smem:[#allocation0]]
  $region61: #{tpu_custom_call.1} parent=0
    _
  %s8 = ssub.s32 1, %s6
  %s9 = scalar_select 0, %s8, %s6
  $region1: #{tpu_custom_call.1} parent=0
    #allocation2 [shape = 'u8[65536]{0}', space=vmem, size = 0x10000, scoped, tag = 'input window, operand 0']
    #allocation3 [shape = 's32[2]{0}', space=sflag, size = 0x8, scoped, tag = 'scoped memory for tpu_custom_call.1']
    #allocation4 [shape = 's32[2]{0}', space=sflag, size = 0x8, scoped, tag = 'scoped memory for tpu_custom_call.1']
    #allocation5 [shape = 'u8[24576]{0}', space=vmem, size = 0x6000, scoped, tag = 'input window, operand 4, single buffered']
    #allocation6 [shape = 's32[1]{0}', space=sflag, size = 0x4, scoped, tag = 'scoped memory for tpu_custom_call.1']
    #allocation7 [shape = 'u8[65536]{0}', space=vmem, size = 0x10000, scoped, tag = 'output window, operand 0']
    %10 = vsyncpa [#allocation3], 0
    %s11 = scalar_lea.sflag [#allocation3], 1
    %12 = vsyncpa %s11, 0
    %13 = vsyncpa [#allocation6], 0
    %14 = vsyncpa [#allocation4], 0
    %s15 = scalar_lea.sflag [#allocation4], 1
    %16 = vsyncpa %s15, 0
    loop: start=0, step=1, limit=4
    $region2: #{tpu_custom_call.1} parent=1 // loop_pre_header
      _
    $region3: #{tpu_custom_call.1} parent=1 // loop_header
      %s18 = sphi 0, %s22
      %p19 = scmp.ge.s32.totalorder %s18, 4
      %s25 = sphi 0, %s37
      %s26 = sphi 0, %s33
      %s27 = sphi 0, %s25
      %s28 = sphi 0, %s26
      %s29 = sphi 0, %s27
      %s30 = sphi 0, %s28
      %s42 = sphi 0, %s44
      %s45 = sphi 0, %s42
      %s46 = sphi 0, %s45
      %s62 = sphi 0, %s46
      %s66 = sphi 0, %s66
      %s68 = sphi 0, %s66
      %s69 = sphi 0, %s68
      %s83 = sphi 0, %s69
      %s87 = sphi 0, %s87
      %s89 = sphi 0, %s87
      %s90 = sphi 0, %s89
      %s104 = sphi 0, %s90
      %s110 = sphi 0, %s112
      %s113 = sphi 0, %s110
      %s114 = sphi 0, %s113
      %s130 = sphi 0, %s114
      %s136 = sphi 0, %s138
      %s139 = sphi 0, %s136
      %s140 = sphi 0, %s139
      %s156 = sphi 0, %s140
      %s164 = sphi 0, %s166
      %s167 = sphi 0, %s164
      %s168 = sphi 0, %s167
      %s184 = sphi 0, %s168
    $region4: #{tpu_custom_call.1} parent=1 // loop_header_branch
      %21 = sbr.rel (%p19) target = $region8
    $region5: #{tpu_custom_call.1} parent=1 // loop_body
      %s23 = ssub.s32 %s18, 1
      %s24 = ssub.s32 %s18, 2
      %s31 = sadd.s32 1, %s26
      %p32 = scmp.ge.s32.totalorder %s31, 2
      %s33 = scalar_select %p32, 0, %s31
      %s34 = sadd.s32 1, %s25
      %s35 = scalar_select %p32, %s34, %s25
      %p36 = scmp.ge.s32.totalorder %s35, 1
      %s37 = scalar_select %p36, 0, %s35
      %s38 = ssub.s32 %s26, %s33
      %s39 = ssub.s32 %s25, %s37
      %s40 = sor.u32 %s38, %s39
      %p41 = scmp.eq.s32.totalorder %s40, 0
      %s43 = sadd.s32 %s42, 1
      %s44 = scalar_select %p41, %s42, %s43
      %p47 = pneg %p41
      %p48 = scmp.eq.s32.totalorder %s18, 1
      %p49 = por %p47, %p48
      %p50 = scmp.ne.s32.totalorder %s42, %s45
      %p51 = scmp.eq.s32.totalorder %s18, 0
      %p52 = por %p50, %p51
      %p53 = scmp.ne.s32.totalorder %s42, %s45
      %p54 = scmp.eq.s32.totalorder %s23, 1
      %p55 = por %p53, %p54
      %p56 = scmp.ne.s32.totalorder %s45, %s46
      %p57 = scmp.eq.s32.totalorder %s23, 0
      %p58 = por %p56, %p57
      %p59 = scmp.ne.s32.totalorder %s45, %s46
      %p60 = scmp.eq.s32.totalorder %s24, 1
      %p61 = por %p59, %p60
      %p63 = scmp.ne.s32.totalorder %s46, %s62
      %p64 = scmp.eq.s32.totalorder %s24, 0
      %p65 = por %p63, %p64
      %s67 = sadd.s32 %s66, 1
      %p70 = scmp.eq.s32.totalorder %s18, 1
      %p71 = scmp.ne.s32.totalorder %s66, %s68
      %p72 = scmp.eq.s32.totalorder %s18, 0
      %p73 = por %p71, %p72
      %p74 = scmp.ne.s32.totalorder %s66, %s68
      %p75 = scmp.eq.s32.totalorder %s23, 1
      %p76 = por %p74, %p75
      %p77 = scmp.ne.s32.totalorder %s68, %s69
      %p78 = scmp.eq.s32.totalorder %s23, 0
      %p79 = por %p77, %p78
      %p80 = scmp.ne.s32.totalorder %s68, %s69
      %p81 = scmp.eq.s32.totalorder %s24, 1
      %p82 = por %p80, %p81
      %p84 = scmp.ne.s32.totalorder %s69, %s83
      %p85 = scmp.eq.s32.totalorder %s24, 0
      %p86 = por %p84, %p85
      %s88 = sadd.s32 %s87, 1
      %p91 = scmp.eq.s32.totalorder %s18, 1
      %p92 = scmp.ne.s32.totalorder %s87, %s89
      %p93 = scmp.eq.s32.totalorder %s18, 0
      %p94 = por %p92, %p93
      %p95 = scmp.ne.s32.totalorder %s87, %s89
      %p96 = scmp.eq.s32.totalorder %s23, 1
      %p97 = por %p95, %p96
      %p98 = scmp.ne.s32.totalorder %s89, %s90
      %p99 = scmp.eq.s32.totalorder %s23, 0
      %p100 = por %p98, %p99
      %p101 = scmp.ne.s32.totalorder %s89, %s90
      %p102 = scmp.eq.s32.totalorder %s24, 1
      %p103 = por %p101, %p102
      %p105 = scmp.ne.s32.totalorder %s90, %s104
      %p106 = scmp.eq.s32.totalorder %s24, 0
      %p107 = por %p105, %p106
      %s108 = ssub.s32 %s25, %s37
      %p109 = scmp.eq.s32.totalorder %s108, 0
      %s111 = sadd.s32 %s110, 1
      %s112 = scalar_select %p109, %s110, %s111
      %p115 = pneg %p109
      %p116 = scmp.eq.s32.totalorder %s18, 1
      %p117 = por %p115, %p116
      %p118 = scmp.ne.s32.totalorder %s110, %s113
      %p119 = scmp.eq.s32.totalorder %s18, 0
      %p120 = por %p118, %p119
      %p121 = scmp.ne.s32.totalorder %s110, %s113
      %p122 = scmp.eq.s32.totalorder %s23, 1
      %p123 = por %p121, %p122
      %p124 = scmp.ne.s32.totalorder %s113, %s114
      %p125 = scmp.eq.s32.totalorder %s23, 0
      %p126 = por %p124, %p125
      %p127 = scmp.ne.s32.totalorder %s113, %s114
      %p128 = scmp.eq.s32.totalorder %s24, 1
      %p129 = por %p127, %p128
      %p131 = scmp.ne.s32.totalorder %s114, %s130
      %p132 = scmp.eq.s32.totalorder %s24, 0
      %p133 = por %p131, %p132
      %s134 = ssub.s32 %s25, %s37
      %p135 = scmp.eq.s32.totalorder %s134, 0
      %s137 = sadd.s32 %s136, 1
      %s138 = scalar_select %p135, %s136, %s137
      %p141 = pneg %p135
      %p142 = scmp.eq.s32.totalorder %s18, 1
      %p143 = por %p141, %p142
      %p144 = scmp.ne.s32.totalorder %s136, %s139
      %p145 = scmp.eq.s32.totalorder %s18, 0
      %p146 = por %p144, %p145
      %p147 = scmp.ne.s32.totalorder %s136, %s139
      %p148 = scmp.eq.s32.totalorder %s23, 1
      %p149 = por %p147, %p148
      %p150 = scmp.ne.s32.totalorder %s139, %s140
      %p151 = scmp.eq.s32.totalorder %s23, 0
      %p152 = por %p150, %p151
      %p153 = scmp.ne.s32.totalorder %s139, %s140
      %p154 = scmp.eq.s32.totalorder %s24, 1
      %p155 = por %p153, %p154
      %p157 = scmp.ne.s32.totalorder %s140, %s156
      %p158 = scmp.eq.s32.totalorder %s24, 0
      %p159 = por %p157, %p158
      %s160 = ssub.s32 %s26, %s33
      %s161 = ssub.s32 %s25, %s37
      %s162 = sor.u32 %s160, %s161
      %p163 = scmp.eq.s32.totalorder %s162, 0
      %s165 = sadd.s32 %s164, 1
      %s166 = scalar_select %p163, %s164, %s165
      %p169 = pneg %p163
      %p170 = scmp.eq.s32.totalorder %s18, 1
      %p171 = por %p169, %p170
      %p172 = scmp.ne.s32.totalorder %s164, %s167
      %p173 = scmp.eq.s32.totalorder %s18, 0
      %p174 = por %p172, %p173
      %p175 = scmp.ne.s32.totalorder %s164, %s167
      %p176 = scmp.eq.s32.totalorder %s23, 1
      %p177 = por %p175, %p176
      %p178 = scmp.ne.s32.totalorder %s167, %s168
      %p179 = scmp.eq.s32.totalorder %s23, 0
      %p180 = por %p178, %p179
      %p181 = scmp.ne.s32.totalorder %s167, %s168
      %p182 = scmp.eq.s32.totalorder %s24, 1
      %p183 = por %p181, %p182
      %p185 = scmp.ne.s32.totalorder %s168, %s184
      %p186 = scmp.eq.s32.totalorder %s24, 0
      %p187 = por %p185, %p186
      %p188 = scmp.le.s32.totalorder 1, %s18
      %p189 = scmp.lt.s32.totalorder %s18, 3
      %p190 = pnand %p188, %p189
      %p191 = pneg %p190
      // Predicated region
      $region9: #{tpu_custom_call.1} parent=5 // pred_check
        _
      $region10: #{tpu_custom_call.1} parent=5 // pred_check_branch
        %193 = sbr.rel (%p190) target = $region12
      $region11: #{tpu_custom_call.1} parent=5 // pred_region
        %s194 = ssub.s32 %s18, 1
        // Predicated region
        $region13: #{tpu_custom_call.1} parent=11 // pred_check
          %p195 = pneg %p79
        $region14: #{tpu_custom_call.1} parent=11 // pred_check_branch
          %197 = sbr.rel (%p195) target = $region16
        $region15: #{tpu_custom_call.1} parent=11 // pred_region
          _
        $region16: #{tpu_custom_call.1} parent=11 // pred_fallthru
          _
        // Predicated region
        $region17: #{tpu_custom_call.1} parent=11 // pred_check
          %p198 = pneg %p100
        $region18: #{tpu_custom_call.1} parent=11 // pred_check_branch
          %200 = sbr.rel (%p198) target = $region20
        $region19: #{tpu_custom_call.1} parent=11 // pred_region
          _
        $region20: #{tpu_custom_call.1} parent=11 // pred_fallthru
          _
        // Predicated region
        $region21: #{tpu_custom_call.1} parent=11 // pred_check
          %p201 = pneg %p126
        $region22: #{tpu_custom_call.1} parent=11 // pred_check_branch
          %203 = sbr.rel (%p201) target = $region24
        $region23: #{tpu_custom_call.1} parent=11 // pred_region
          %p204 = scmp.lt.s32.totalorder %s27, 0
          %s205 = scalar_select %p204, %s27, 0
          %s206 = smul.addr %s205, 8
          %s207 = scalar_lea.vmem %s3, %s206
        $region24: #{tpu_custom_call.1} parent=11 // pred_fallthru
          _
        // Predicated region
        $region25: #{tpu_custom_call.1} parent=11 // pred_check
          %p208 = pneg %p152
        $region26: #{tpu_custom_call.1} parent=11 // pred_check_branch
          %210 = sbr.rel (%p208) target = $region28
        $region27: #{tpu_custom_call.1} parent=11 // pred_region
          %s212 = ssub.s32 768, 768
          %213 = vsyncadd [#allocation6], %s212
          %s214 = smul.addr %s27, 128
          %s215 = scalar_lea.hbm %s4, %s214
          %s216 = sshll.u32 [#allocation5], 4
          %s217 = int_to_ptr.vmem [resolvable:$true] %s216
          %222 = dma.hbm_to_vmem [thread:$0]  %s215, 768, %s217, [#allocation6], 128, 128, 8
        $region28: #{tpu_custom_call.1} parent=11 // pred_fallthru
          _
      $region12: #{tpu_custom_call.1} parent=5 // pred_fallthru
        _
      %p223 = scmp.lt.s32.totalorder %s18, 2
      // Predicated region
      $region29: #{tpu_custom_call.1} parent=5 // pred_check
        %p224 = pneg %p223
      $region30: #{tpu_custom_call.1} parent=5 // pred_check_branch
        %226 = sbr.rel (%p224) target = $region32
      $region31: #{tpu_custom_call.1} parent=5 // pred_region
        // Predicated region
        $region33: #{tpu_custom_call.1} parent=31 // pred_check
          %p227 = pneg %p52
        $region34: #{tpu_custom_call.1} parent=31 // pred_check_branch
          %229 = sbr.rel (%p227) target = $region36
        $region35: #{tpu_custom_call.1} parent=31 // pred_region
          %s230 = sand.u32 %s42, 1
          %s231 = scalar_lea.sflag [#allocation3], %s230
          %s232 = sand.u32 %s42, 1
          %s233 = smul.addr %s232, 64
          %s234 = scalar_lea.vmem [#allocation2], %s233
          %s236 = ssub.s32 1024, 1024
          %237 = vsyncadd %s231, %s236
          %s238 = smul.addr %s26, 8
          %s239 = sadd.s32 %s25, %s238
          %s240 = smul.addr %s239, 128
          %s241 = scalar_lea.hbm %s0, %s240
          %s242 = sshll.u32 %s234, 4
          %s243 = int_to_ptr.vmem [resolvable:$true] %s242
          %248 = dma.hbm_to_vmem [thread:$0]  %s241, 1024, %s243, %s231, 128, 128, 8
        $region36: #{tpu_custom_call.1} parent=31 // pred_fallthru
          _
      $region32: #{tpu_custom_call.1} parent=5 // pred_fallthru
        _
      %p249 = scmp.le.s32.totalorder 1, %s18
      %p250 = scmp.lt.s32.totalorder %s18, 3
      %p251 = pnand %p249, %p250
      %p252 = pneg %p251
      // Predicated region
      $region37: #{tpu_custom_call.1} parent=5 // pred_check
        _
      $region38: #{tpu_custom_call.1} parent=5 // pred_check_branch
        %254 = sbr.rel (%p251) target = $region40
      $region39: #{tpu_custom_call.1} parent=5 // pred_region
        %s255 = ssub.s32 %s18, 1
        %s256 = sand.u32 %s45, 1
        %s257 = scalar_lea.sflag [#allocation3], %s256
        %s258 = sand.u32 %s45, 1
        %s259 = smul.addr %s258, 64
        %s260 = scalar_lea.vmem [#allocation2], %s259
        // Predicated region
        $region41: #{tpu_custom_call.1} parent=39 // pred_check
          %p261 = pneg %p58
        $region42: #{tpu_custom_call.1} parent=39 // pred_check_branch
          %263 = sbr.rel (%p261) target = $region44
        $region43: #{tpu_custom_call.1} parent=39 // pred_region
          %264 = dma.done %s257, 1024
        $region44: #{tpu_custom_call.1} parent=39 // pred_fallthru
          _
        // Predicated region
        $region45: #{tpu_custom_call.1} parent=39 // pred_check
          %p265 = pneg %p152
        $region46: #{tpu_custom_call.1} parent=39 // pred_check_branch
          %267 = sbr.rel (%p265) target = $region48
        $region47: #{tpu_custom_call.1} parent=39 // pred_region
          %268 = dma.done [#allocation6], 768
        $region48: #{tpu_custom_call.1} parent=39 // pred_fallthru
          _
        %s269 = sand.u32 %s45, 1
        %s270 = scalar_lea.sflag [#allocation3], %s269
        %s271 = sand.u32 %s45, 1
        %s272 = smul.addr %s271, 64
        %s273 = scalar_lea.vmem [#allocation2], %s272
        %p274 = pneg %p58
        %p275 = pneg %p55
        %p276 = pneg %p79
        %p277 = pneg %p76
        %p278 = pneg %p100
        %p279 = pneg %p97
        %p280 = scmp.lt.s32.totalorder %s27, 0
        %s281 = scalar_select %p280, %s27, 0
        %s282 = smul.addr %s281, 8
        %s283 = scalar_lea.vmem %s3, %s282
        %p284 = pneg %p126
        %p285 = pneg %p123
        %p286 = pneg %p152
        %p287 = pneg %p149
        %p288 = pneg %p180
        %p289 = pneg %p177
        %s290 = sand.u32 %s167, 1
        %s291 = scalar_lea.sflag [#allocation4], %s290
        %s292 = sand.u32 %s167, 1
        %s293 = smul.addr %s292, 64
        %s294 = scalar_lea.vmem [#allocation7], %s293
        %p295 = scmp.lt.s32.totalorder %s27, 0
        %s296 = scalar_select %p295, %s27, 0
        %s297 = smul.addr %s296, 8
        %s298 = scalar_lea.vmem %s3, %s297
        %v300 = vld [vmem:[%s260] sm:$0xff]
        %v301 = vld [vmem:[%s260 + $0x8] sm:$0xff]
        %v302 = vld [vmem:[%s260 + $0x10] sm:$0xff]
        %v303 = vld [vmem:[%s260 + $0x18] sm:$0xff]
        %v304 = vld [vmem:[%s260 + $0x20] sm:$0xff]
        %v305 = vld [vmem:[%s260 + $0x28] sm:$0xff]
        %v306 = vld [vmem:[%s260 + $0x30] sm:$0xff]
        %v307 = vld [vmem:[%s260 + $0x38] sm:$0xff]
        %v308 = vpack.c.bf16 %v301, %v300
        %v309 = vpack.c.bf16 %v303, %v302
        %v310 = vpack.c.bf16 %v305, %v304
        %v311 = vpack.c.bf16 %v307, %v306
        %v312 = vld [vmem:[%s1] sm:$0xf]
        %v313 = vld [vmem:[%s1 + $0x4] sm:$0xf]
        %v314 = vld [vmem:[%s1 + $0x8] sm:$0xf]
        %v315 = vld [vmem:[%s1 + $0xc] sm:$0xf]
        %v316 = vld [vmem:[%s1 + $0x10] sm:$0xf]
        %v317 = vld [vmem:[%s1 + $0x14] sm:$0xf]
        %v318 = vld [vmem:[%s1 + $0x18] sm:$0xf]
        %v319 = vld [vmem:[%s1 + $0x1c] sm:$0xf]
        %v320 = vld [vmem:[%s1 + $0x20] sm:$0xf]
        %v321 = vld [vmem:[%s1 + $0x24] sm:$0xf]
        %v322 = vld [vmem:[%s1 + $0x28] sm:$0xf]
        %v323 = vld [vmem:[%s1 + $0x2c] sm:$0xf]
        %v336 = vunpack.c.l.b16 %v312
        %v337 = vunpack.c.l.b16 %v313
        %v338 = vunpack.c.l.b16 %v314
        %v339 = vunpack.c.l.b16 %v315
        %v340 = vunpack.c.l.b16 %v316
        %v341 = vunpack.c.l.b16 %v317
        %v342 = vunpack.c.l.b16 %v318
        %v343 = vunpack.c.l.b16 %v319
        %v344 = vunpack.c.l.b16 %v320
        %v345 = vunpack.c.l.b16 %v321
        %v346 = vunpack.c.l.b16 %v322
        %v347 = vunpack.c.l.b16 %v323
        %v348 = vpack.c.b16 %v337, %v336
        %v349 = vpack.c.b16 %v339, %v338
        %v350 = vpack.c.b16 %v341, %v340
        %v351 = vpack.c.b16 %v343, %v342
        %v352 = vpack.c.b16 %v345, %v344
        %v353 = vpack.c.b16 %v347, %v346
        %vm354 = vcmask 523264
        %v356 = vsel %vm354, %v348, 0
        %v359 = vsel %vm354, %v349, 0
        %v362 = vsel %vm354, %v350, 0
        %v365 = vsel %vm354, %v351, 0
        %v368 = vsel %vm354, %v352, 0
        %v371 = vsel %vm354, %v353, 0
        %373 = vmatprep.subr.bf16.mxu0 0
        %374 = vmatpush1.bf16.msra.mxu0 %v308
        %375 = vmatprep.subr.bf16.mxu0 0
        %376 = vmatpush1.bf16.msra.mxu0 %v309
        %377 = vmatprep.subr.bf16.mxu0 0
        %378 = vmatpush1.bf16.msra.mxu0 %v310
        %379 = vmatprep.subr.bf16.mxu0 0
        %380 = vmatpush1.bf16.msra.mxu0 %v311
        %381 = vmatprep.subr.bf16.mxu0 0
        %382 = vmatpush1.bf16.msra.mxu0 0
        %383 = vmatprep.subr.bf16.mxu0 0
        %384 = vmatpush1.bf16.msra.mxu0 0
        %385 = vmatprep.subr.bf16.mxu0 0
        %386 = vmatpush1.bf16.msra.mxu0 0
        %387 = vmatprep.subr.bf16.mxu0 0
        %388 = vmatpush1.bf16.msra.mxu0 0
        %389 = vmatprep.subr.bf16.mxu0 0
        %390 = vmatpush1.bf16.msra.mxu0 0
        %391 = vmatprep.subr.bf16.mxu0 0
        %392 = vmatpush1.bf16.msra.mxu0 0
        %393 = vmatprep.subr.bf16.mxu0 0
        %394 = vmatpush1.bf16.msra.mxu0 0
        %395 = vmatprep.subr.bf16.mxu0 0
        %396 = vmatpush1.bf16.msra.mxu0 0
        %397 = vmatprep.subr.bf16.mxu0 0
        %398 = vmatpush1.bf16.msra.mxu0 0
        %399 = vmatprep.subr.bf16.mxu0 0
        %400 = vmatpush1.bf16.msra.mxu0 0
        %401 = vmatprep.subr.bf16.mxu0 0
        %402 = vmatpush1.bf16.msra.mxu0 0
        %403 = vmatprep.subr.bf16.mxu0 0
        %404 = vmatpush1.bf16.msra.mxu0 0
        %405 = vmatprep.mubr.bf16.mxu0 0
        %406 = vmatmul.mubr.bf16.gmra.mrb[0].mxu0 %v356
        %v407 = vpop.f32.mrb[0].mxu0
        %v408 = vadd.f32 0.0, %v407
        %v409 = vpop.f32.mrb[0].mxu0
        %v410 = vpop.f32.mrb[0].mxu0
        %v411 = vadd.f32 0.0, %v410
        %v412 = vpop.f32.mrb[0].mxu0
        %413 = vmatprep.mubr.bf16.mxu0 0
        %414 = vmatmul.mubr.bf16.gmra.mrb[0].mxu0 %v359
        %v415 = vpop.f32.mrb[0].mxu0
        %v416 = vadd.f32 0.0, %v415
        %v417 = vpop.f32.mrb[0].mxu0
        %v418 = vpop.f32.mrb[0].mxu0
        %v419 = vadd.f32 0.0, %v418
        %v420 = vpop.f32.mrb[0].mxu0
        %421 = vmatprep.mubr.bf16.mxu0 0
        %422 = vmatmul.mubr.bf16.gmra.mrb[0].mxu0 %v362
        %v423 = vpop.f32.mrb[0].mxu0
        %v424 = vadd.f32 0.0, %v423
        %v425 = vpop.f32.mrb[0].mxu0
        %v426 = vpop.f32.mrb[0].mxu0
        %v427 = vadd.f32 0.0, %v426
        %v428 = vpop.f32.mrb[0].mxu0
        %429 = vmatprep.mubr.bf16.mxu0 0
        %430 = vmatmul.mubr.bf16.gmra.mrb[0].mxu0 %v365
        %v431 = vpop.f32.mrb[0].mxu0
        %v432 = vadd.f32 0.0, %v431
        %v433 = vpop.f32.mrb[0].mxu0
        %v434 = vpop.f32.mrb[0].mxu0
        %v435 = vadd.f32 0.0, %v434
        %v436 = vpop.f32.mrb[0].mxu0
        %437 = vmatprep.mubr.bf16.mxu0 0
        %438 = vmatmul.mubr.bf16.gmra.mrb[0].mxu0 %v368
        %v439 = vpop.f32.mrb[0].mxu0
        %v440 = vadd.f32 0.0, %v439
        %v441 = vpop.f32.mrb[0].mxu0
        %v442 = vpop.f32.mrb[0].mxu0
        %v443 = vadd.f32 0.0, %v442
        %v444 = vpop.f32.mrb[0].mxu0
        %445 = vmatprep.mubr.bf16.mxu0 0
        %446 = vmatmul.mubr.bf16.gmra.mrb[0].mxu0 %v371
        %v447 = vpop.f32.mrb[0].mxu0
        %v448 = vadd.f32 0.0, %v447
        %v449 = vpop.f32.mrb[0].mxu0
        %v450 = vpop.f32.mrb[0].mxu0
        %v451 = vadd.f32 0.0, %v450
        %v452 = vpop.f32.mrb[0].mxu0
        %453 = vdwg.mxu0
        %v454 = vld [vmem:[%s298] sm:$0xff]
        %v455 = vld [vmem:[%s298 + $0x8] sm:$0xff]
        %v456 = vld [vmem:[%s298 + $0x10] sm:$0xff]
        %v457 = vld [vmem:[%s298 + $0x18] sm:$0xff]
        %v458 = vld [vmem:[%s298 + $0x20] sm:$0xff]
        %v459 = vld [vmem:[%s298 + $0x28] sm:$0xff]
        %v460 = vld [vmem:[#allocation5] sm:$0xff]
        %v461 = vld [vmem:[#allocation5 + $0x8] sm:$0xff]
        %v462 = vld [vmem:[#allocation5 + $0x10] sm:$0xff]
        %v463 = vld [vmem:[#allocation5 + $0x18] sm:$0xff]
        %v464 = vld [vmem:[#allocation5 + $0x20] sm:$0xff]
        %v465 = vld [vmem:[#allocation5 + $0x28] sm:$0xff]
        %v466 = vmul.f32 %v408, %v454
        %v467 = vmul.f32 %v411, %v455
        %v468 = vmul.f32 %v416, %v456
        %v469 = vmul.f32 %v419, %v457
        %v470 = vmul.f32 %v424, %v458
        %v471 = vmul.f32 %v427, %v459
        %v472 = vmul.f32 %v432, %v460
        %v473 = vmul.f32 %v435, %v461
        %v474 = vmul.f32 %v440, %v462
        %v475 = vmul.f32 %v443, %v463
        %v476 = vmul.f32 %v448, %v464
        %v477 = vmul.f32 %v451, %v465
        %v478 = vsub.f32 %v466, %v472
        %v479 = vsub.f32 %v467, %v473
        %v480 = vsub.f32 %v468, %v474
        %v481 = vsub.f32 %v469, %v475
        %v482 = vsub.f32 %v470, %v476
        %v483 = vsub.f32 %v471, %v477
        %v484 = vmul.f32 %v408, %v460
        %v485 = vmul.f32 %v411, %v461
        %v486 = vmul.f32 %v416, %v462
        %v487 = vmul.f32 %v419, %v463
        %v488 = vmul.f32 %v424, %v464
        %v489 = vmul.f32 %v427, %v465
        %v490 = vmul.f32 %v432, %v454
        %v491 = vmul.f32 %v435, %v455
        %v492 = vmul.f32 %v440, %v456
        %v493 = vmul.f32 %v443, %v457
        %v494 = vmul.f32 %v448, %v458
        %v495 = vmul.f32 %v451, %v459
        %v496 = vadd.f32 %v484, %v490
        %v497 = vadd.f32 %v485, %v491
        %v498 = vadd.f32 %v486, %v492
        %v499 = vadd.f32 %v487, %v493
        %v500 = vadd.f32 %v488, %v494
        %v501 = vadd.f32 %v489, %v495
        %v502 = vpack.c.bf16 %v479, %v478
        %v503 = vpack.c.bf16 %v481, %v480
        %v504 = vpack.c.bf16 %v483, %v482
        %v505 = vpack.c.bf16 %v497, %v496
        %v506 = vpack.c.bf16 %v499, %v498
        %v507 = vpack.c.bf16 %v501, %v500
        %v508 = vld [vmem:[%s2] sm:$0xf]
        %v509 = vld [vmem:[%s2 + $0x4] sm:$0xf]
        %v510 = vld [vmem:[%s2 + $0x8] sm:$0xf]
        %v511 = vld [vmem:[%s2 + $0xc] sm:$0xf]
        %v512 = vld [vmem:[%s2 + $0x10] sm:$0xf]
        %v513 = vld [vmem:[%s2 + $0x14] sm:$0xf]
        %v514 = vld [vmem:[%s2 + $0x18] sm:$0xf]
        %v515 = vld [vmem:[%s2 + $0x1c] sm:$0xf]
        %v524 = vunpack.c.l.b16 %v508
        %v525 = vunpack.c.l.b16 %v509
        %v526 = vunpack.c.l.b16 %v510
        %v527 = vunpack.c.l.b16 %v511
        %v528 = vunpack.c.l.b16 %v512
        %v529 = vunpack.c.l.b16 %v513
        %v530 = vunpack.c.l.b16 %v514
        %v531 = vunpack.c.l.b16 %v515
        %v532 = vpack.c.b16 %v525, %v524
        %v533 = vpack.c.b16 %v527, %v526
        %v534 = vpack.c.b16 %v529, %v528
        %v535 = vpack.c.b16 %v531, %v530
        %vm536 = vcmask 785408
        %v538 = vsel %vm536, %v532, 0
        %v541 = vsel %vm536, %v533, 0
        %v544 = vsel %vm536, %v534, 0
        %v547 = vsel %vm536, %v535, 0
        %549 = vmatprep.subr.bf16.mxu0 0
        %550 = vmatpush1.bf16.msra.mxu0 %v502
        %551 = vmatprep.subr.bf16.mxu0 0
        %552 = vmatpush1.bf16.msra.mxu0 %v503
        %553 = vmatprep.subr.bf16.mxu0 0
        %554 = vmatpush1.bf16.msra.mxu0 %v504
        %555 = vmatprep.subr.bf16.mxu0 0
        %556 = vmatpush1.bf16.msra.mxu0 %v505
        %557 = vmatprep.subr.bf16.mxu0 0
        %558 = vmatpush1.bf16.msra.mxu0 %v506
        %559 = vmatprep.subr.bf16.mxu0 0
        %560 = vmatpush1.bf16.msra.mxu0 %v507
        %561 = vmatprep.subr.bf16.mxu0 0
        %562 = vmatpush1.bf16.msra.mxu0 0
        %563 = vmatprep.subr.bf16.mxu0 0
        %564 = vmatpush1.bf16.msra.mxu0 0
        %565 = vmatprep.subr.bf16.mxu0 0
        %566 = vmatpush1.bf16.msra.mxu0 0
        %567 = vmatprep.subr.bf16.mxu0 0
        %568 = vmatpush1.bf16.msra.mxu0 0
        %569 = vmatprep.subr.bf16.mxu0 0
        %570 = vmatpush1.bf16.msra.mxu0 0
        %571 = vmatprep.subr.bf16.mxu0 0
        %572 = vmatpush1.bf16.msra.mxu0 0
        %573 = vmatprep.subr.bf16.mxu0 0
        %574 = vmatpush1.bf16.msra.mxu0 0
        %575 = vmatprep.subr.bf16.mxu0 0
        %576 = vmatpush1.bf16.msra.mxu0 0
        %577 = vmatprep.subr.bf16.mxu0 0
        %578 = vmatpush1.bf16.msra.mxu0 0
        %579 = vmatprep.subr.bf16.mxu0 0
        %580 = vmatpush1.bf16.msra.mxu0 0
        %581 = vmatprep.mubr.bf16.mxu0 0
        %582 = vmatmul.mubr.bf16.gmra.mrb[0].mxu0 %v538
        %v583 = vpop.f32.mrb[0].mxu0
        %v584 = vadd.f32 0.0, %v583
        %v585 = vpop.f32.mrb[0].mxu0
        %v586 = vpop.f32.mrb[0].mxu0
        %v587 = vadd.f32 0.0, %v586
        %v588 = vpop.f32.mrb[0].mxu0
        %589 = vmatprep.mubr.bf16.mxu0 0
        %590 = vmatmul.mubr.bf16.gmra.mrb[0].mxu0 %v541
        %v591 = vpop.f32.mrb[0].mxu0
        %v592 = vadd.f32 0.0, %v591
        %v593 = vpop.f32.mrb[0].mxu0
        %v594 = vpop.f32.mrb[0].mxu0
        %v595 = vadd.f32 0.0, %v594
        %v596 = vpop.f32.mrb[0].mxu0
        %597 = vmatprep.mubr.bf16.mxu0 0
        %598 = vmatmul.mubr.bf16.gmra.mrb[0].mxu0 %v544
        %v599 = vpop.f32.mrb[0].mxu0
        %v600 = vadd.f32 0.0, %v599
        %v601 = vpop.f32.mrb[0].mxu0
        %v602 = vpop.f32.mrb[0].mxu0
        %v603 = vadd.f32 0.0, %v602
        %v604 = vpop.f32.mrb[0].mxu0
        %605 = vmatprep.mubr.bf16.mxu0 0
        %606 = vmatmul.mubr.bf16.gmra.mrb[0].mxu0 %v547
        %v607 = vpop.f32.mrb[0].mxu0
        %v608 = vadd.f32 0.0, %v607
        %v609 = vpop.f32.mrb[0].mxu0
        %v610 = vpop.f32.mrb[0].mxu0
        %v611 = vadd.f32 0.0, %v610
        %v612 = vpop.f32.mrb[0].mxu0
        %613 = vdwg.mxu0
        %614 = vst [vmem:[%s294] sm:$0xff] %v584
        %615 = vst [vmem:[%s294 + $0x8] sm:$0xff] %v587
        %616 = vst [vmem:[%s294 + $0x10] sm:$0xff] %v592
        %617 = vst [vmem:[%s294 + $0x18] sm:$0xff] %v595
        %618 = vst [vmem:[%s294 + $0x20] sm:$0xff] %v600
        %619 = vst [vmem:[%s294 + $0x28] sm:$0xff] %v603
        %620 = vst [vmem:[%s294 + $0x30] sm:$0xff] %v608
        %621 = vst [vmem:[%s294 + $0x38] sm:$0xff] %v611
        %s622 = sand.u32 %s167, 1
        %s623 = scalar_lea.sflag [#allocation4], %s622
        %s624 = sand.u32 %s167, 1
        %s625 = smul.addr %s624, 64
        %s626 = scalar_lea.vmem [#allocation7], %s625
        // Predicated region
        $region49: #{tpu_custom_call.1} parent=39 // pred_check
          %p627 = pneg %p177
        $region50: #{tpu_custom_call.1} parent=39 // pred_check_branch
          %629 = sbr.rel (%p627) target = $region52
        $region51: #{tpu_custom_call.1} parent=39 // pred_region
          %s631 = ssub.s32 1024, 1024
          %632 = vsyncadd %s623, %s631
          %s633 = smul.addr %s28, 8
          %s634 = sadd.s32 %s27, %s633
          %s635 = smul.addr %s634, 128
          %s636 = scalar_lea.hbm %s5, %s635
          %s637 = sshll.u32 %s626, 4
          %s638 = int_to_ptr.vmem [resolvable:$true] %s637
          %643 = dma.vmem_to_hbm [thread:$0]  %s638, 1024, %s636, %s623, 128, 128, 8
        $region52: #{tpu_custom_call.1} parent=39 // pred_fallthru
          _
      $region40: #{tpu_custom_call.1} parent=5 // pred_fallthru
        _
      %p644 = scmp.le.s32.totalorder 2, %s18
      // Predicated region
      $region53: #{tpu_custom_call.1} parent=5 // pred_check
        %p645 = pneg %p644
      $region54: #{tpu_custom_call.1} parent=5 // pred_check_branch
        %647 = sbr.rel (%p645) target = $region56
      $region55: #{tpu_custom_call.1} parent=5 // pred_region
        %s648 = ssub.s32 %s18, 2
        // Predicated region
        $region57: #{tpu_custom_call.1} parent=55 // pred_check
          %p649 = pneg %p183
        $region58: #{tpu_custom_call.1} parent=55 // pred_check_branch
          %651 = sbr.rel (%p649) target = $region60
        $region59: #{tpu_custom_call.1} parent=55 // pred_region
          %s652 = sand.u32 %s168, 1
          %s653 = scalar_lea.sflag [#allocation4], %s652
          %s654 = sand.u32 %s168, 1
          %s655 = smul.addr %s654, 64
          %s656 = scalar_lea.vmem [#allocation7], %s655
          %657 = dma.done %s653, 1024
        $region60: #{tpu_custom_call.1} parent=55 // pred_fallthru
          _
      $region56: #{tpu_custom_call.1} parent=5 // pred_fallthru
        _
    $region6: #{tpu_custom_call.1} parent=1 // loop_footer
      %s22 = sadd.s32 1, %s18
    $region7: #{tpu_custom_call.1} parent=1 // loop_footer_branch
      %17 = sbr.rel target = $region3
    $region8: #{tpu_custom_call.1} parent=1 // loop_exit
      _
    %658 = vsyncpa [#allocation3], 1
    %s659 = scalar_lea.sflag [#allocation3], 1
    %660 = vsyncpa %s659, 1
    %661 = vsyncpa [#allocation6], 1
    %662 = vsyncpa [#allocation4], 1
    %s663 = scalar_lea.sflag [#allocation4], 1
    %664 = vsyncpa %s663, 1

</llo_original>
